<compile_context>
chip_gen: v7x
topology: tpu7x:2x2x1
jax: 0.10.0
libtpu: 0.0.40
codegen_flags: <defaults>
</compile_context>

<pallas_src>
import functools

import jax
import jax.numpy as jnp
from jax.experimental import pallas as pl
from jax.experimental.pallas import tpu as pltpu

_LANE = 128


def _bn_conv_kernel(x_ref, w_ref, s_ref, b_ref, o_ref, *,
                    KH, KW, S, TOH, OW, apply_relu):
    """One grid step: output rows [t*TOH,(t+1)*TOH) x one Cout tile of image n.

    x_ref : (1, Hp, Wp, Cin)      zero-padded NHWC slab (VMEM-resident per n)
    w_ref : (KH*KW*Cin, TN)       conv weights, K laid out (kh, kw, cin)-major
    s_ref : (1, TN)  f32          BN scale  = gamma / sqrt(var + eps)
    b_ref : (1, TN)  f32          BN shift  = beta - mean * scale
    o_ref : (1, 1, TOH*OW, TN)    lane-dense output tile (input dtype)
    """
    cin = x_ref.shape[-1]
    t = pl.program_id(2)
    row0 = t * (TOH * S)

    # Build the im2col LHS for this tile in VMEM: K = KH*KW*Cin contraction.
    taps = []
    for kh in range(KH):                       # hoisted row-slab load per kh
        if S == 1:
            rows = x_ref[0, pl.ds(row0 + kh, TOH), :, :]        # (TOH, Wp, Cin)
        else:
            rows = x_ref[0, pl.ds(row0 + kh, TOH, S), :, :]
        for kw in range(KW):
            if S == 1:
                taps.append(rows[:, kw:kw + OW, :])
            else:
                taps.append(rows[:, kw:kw + (OW - 1) * S + 1:S, :])
    lhs = jnp.concatenate(taps, axis=-1).reshape(TOH * OW, KH * KW * cin)

    # Single MXU contraction (f32 accumulate) + f32 BN/ReLU epilogue.
    acc = jnp.dot(lhs, w_ref[...], preferred_element_type=jnp.float32)
    y = acc * s_ref[...] + b_ref[...]
    if apply_relu:
        y = jnp.maximum(y, 0.0)
    o_ref[0, 0] = y.astype(o_ref.dtype)


def _vmem_cap_bytes():
    """~85% of physical VMEM (respects v7x's 64 MiB); conservative fallback."""
    try:
        return int(0.85 * pltpu.get_tpu_info().vmem_capacity_bytes)
    except Exception:
        return 48 * (1 << 20)


def bn_conv2d(x_nchw, weight, gamma, beta, running_mean, running_var, *,
              stride=1, padding=1, dilation=1, groups=1, eps=1e-5,
              activation=True, compute_dtype=jnp.bfloat16, tile_rows=512):
    """Fused Conv2d(bias=False) + BatchNorm2d(eval) + optional ReLU.

    x_nchw : (N, Cin, H, W)
    weight : (Cout, Cin, KH, KW)   (PyTorch OIHW layout)
    returns: (N, Cout, OH, OW) in the input dtype
    """
    assert dilation == 1 and groups == 1, "TODO(synk): dilation/groups > 1"
    N, Cin, H, W = x_nchw.shape
    Cout, Cin_w, KH, KW = weight.shape
    assert Cin == Cin_w
    S, P = stride, padding
    OH = (H + 2 * P - KH) // S + 1
    OW = (W + 2 * P - KW) // S + 1
    out_dtype = x_nchw.dtype
    K = KH * KW * Cin

    # Lane-dense Cout tiling: 256-wide N tiles for the 256-deep v6e/v7x MXU
    # when the channel count warrants it, otherwise a single 128 tile.
    if Cout > _LANE:
        TN = 2 * _LANE
        Cout_pad = pl.cdiv(Cout, TN) * TN
    else:
        TN = _LANE
        Cout_pad = _LANE
    n_co = Cout_pad // TN

    # Output-row tiling: prefer a divisor of OH (no overhang waste), target
    # ~tile_rows output pixels per grid step.
    cap = max(1, min(OH, tile_rows // max(OW, 1)))
    divs = [d for d in range(1, cap + 1) if OH % d == 0]
    TOH = divs[-1] if divs else 1
    if 2 * TOH <= cap:          # poor divisor (e.g. prime OH): accept overhang
        TOH = cap
    n_oh = pl.cdiv(OH, TOH)
    OH_pad = n_oh * TOH
    M = TOH * OW

    # ---- glue: cast -> NHWC -> zero pad (conv padding + row-tile overhang) --
    x = jnp.transpose(x_nchw.astype(compute_dtype), (0, 2, 3, 1))
    rows_needed = (OH_pad - 1) * S + KH
    pad_bottom = max(P, rows_needed - (H + P))
    xp = jnp.pad(x, ((0, 0), (P, pad_bottom), (P, P), (0, 0)))
    Hp, Wp = H + P + pad_bottom, W + 2 * P

    # ---- BN (eval) epilogue params (applied in f32 inside the kernel) -------
    scale = (gamma.astype(jnp.float32) /
             jnp.sqrt(running_var.astype(jnp.float32) + eps))
    shift = beta.astype(jnp.float32) - running_mean.astype(jnp.float32) * scale
    s_pad = jnp.pad(scale, (0, Cout_pad - Cout)).reshape(1, Cout_pad)
    b_pad = jnp.pad(shift, (0, Cout_pad - Cout)).reshape(1, Cout_pad)

    # (Cout, Cin, KH, KW) -> (KH, KW, Cin, Cout) -> (K, Cout_pad); cast once.
    w = jnp.transpose(weight, (2, 3, 1, 0)).reshape(K, Cout)
    w = jnp.pad(w, ((0, 0), (0, Cout_pad - Cout))).astype(compute_dtype)

    # ---- VMEM budget / compiler params --------------------------------------
    bpe = jnp.dtype(compute_dtype).itemsize
    obpe = jnp.dtype(out_dtype).itemsize
    est = (2 * Hp * Wp * Cin * bpe          # input slab (double-buffered)
           + 2 * K * TN * bpe               # weight tile
           + 4 * TN * 4                     # scale + shift
           + 2 * M * TN * obpe              # output tile
           + 2 * M * K * bpe                # in-VMEM im2col LHS temps
           + M * TN * 4)                    # f32 dot result
    # NB: weight/scale/shift blocks have a constant index within a Cout stripe,
    #     so Mosaic does not re-DMA them across row tiles; single-buffering
    #     them (pl.Buffered(1)) would reclaim a bit more VMEM if ever needed.
    cp_kwargs = dict(dimension_semantics=("parallel", "parallel", "parallel"))
    need = int(1.5 * est)
    if need > 16 * (1 << 20):
        cp_kwargs["vmem_limit_bytes"] = min(max(need, 32 << 20),
                                            _vmem_cap_bytes())
    compiler_params = pltpu.CompilerParams(**cp_kwargs)

    cost = pl.CostEstimate(
        flops=2 * N * OH_pad * OW * K * Cout_pad,
        transcendentals=0,
        bytes_accessed=int(N * Hp * Wp * Cin * bpe + K * Cout_pad * bpe
                           + 2 * Cout_pad * 4
                           + N * OH_pad * OW * Cout_pad * obpe))

    kernel = functools.partial(_bn_conv_kernel, KH=KH, KW=KW, S=S,
                               TOH=TOH, OW=OW, apply_relu=activation)

    out = pl.pallas_call(
        kernel,
        out_shape=jax.ShapeDtypeStruct((N, n_oh, M, Cout_pad), out_dtype),
        grid_spec=pltpu.PrefetchScalarGridSpec(
            num_scalar_prefetch=0,
            grid=(N, n_co, n_oh),            # co before t: weight tile resident
            in_specs=[
                pl.BlockSpec((1, Hp, Wp, Cin), lambda n, co, t: (n, 0, 0, 0)),
                pl.BlockSpec((K, TN), lambda n, co, t: (0, co)),
                pl.BlockSpec((1, TN), lambda n, co, t: (0, co)),
                pl.BlockSpec((1, TN), lambda n, co, t: (0, co)),
            ],
            out_specs=pl.BlockSpec((1, 1, M, TN),
                                   lambda n, co, t: (n, t, 0, co)),
        ),
        compiler_params=compiler_params,
        cost_estimate=cost,
    )(xp, w, s_pad, b_pad)

    out = out.reshape(N, OH_pad, OW, Cout_pad)[:, :OH, :, :Cout]
    return jnp.transpose(out, (0, 3, 1, 2))          # back to NCHW, input dtype


def _reference(x_nchw, weight, gamma, beta, mean, var, *, stride, padding, eps):
    y = jax.lax.conv_general_dilated(
        x_nchw, weight, window_strides=(stride, stride),
        padding=[(padding, padding), (padding, padding)],
        dimension_numbers=("NCHW", "OIHW", "NCHW"))
    scale = gamma / jnp.sqrt(var + eps)
    bias = beta - mean * scale
    y = y * scale[None, :, None, None] + bias[None, :, None, None]
    return jnp.maximum(y, 0.0)


if __name__ == "__main__":
    key = jax.random.PRNGKey(0)
    k_x, k_w, k_g, k_b, k_m, k_v = jax.random.split(key, 6)

    # BN_Conv2d(in_channels=4, out_channels=8, kernel_size=3, stride=1, padding=1)
    N, Cin, H, W = 2, 4, 16, 16
    Cout, KH, KW = 8, 3, 3
    stride, padding, eps = 1, 1, 1e-5

    x = jax.random.normal(k_x, (N, Cin, H, W), dtype=jnp.float32)
    weight = jax.random.normal(k_w, (Cout, Cin, KH, KW), dtype=jnp.float32) * 0.1
    gamma = 1.0 + 0.1 * jax.random.normal(k_g, (Cout,), dtype=jnp.float32)
    beta = 0.1 * jax.random.normal(k_b, (Cout,), dtype=jnp.float32)
    running_mean = 0.1 * jax.random.normal(k_m, (Cout,), dtype=jnp.float32)
    running_var = jnp.abs(1.0 + 0.1 * jax.random.normal(k_v, (Cout,),
                                                        dtype=jnp.float32))

    ref = _reference(x, weight, gamma, beta, running_mean, running_var,
                     stride=stride, padding=padding, eps=eps)

    # Fast path: bf16-fed MXU, f32 accumulate + f32 BN/ReLU epilogue.
    fn_bf16 = jax.jit(functools.partial(bn_conv2d, stride=stride,
                                        padding=padding, eps=eps,
                                        activation=True,
                                        compute_dtype=jnp.bfloat16))
    out_bf16 = jax.block_until_ready(
        fn_bf16(x, weight, gamma, beta, running_mean, running_var))
    assert out_bf16.shape == (N, Cout, H, W)
    assert jnp.allclose(out_bf16, ref, atol=5e-2, rtol=5e-2), "bf16 mismatch"

    # Full-precision path, tighter tolerance.
    fn_f32 = jax.jit(functools.partial(bn_conv2d, stride=stride,
                                       padding=padding, eps=eps,
                                       activation=True,
                                       compute_dtype=jnp.float32))
    out_f32 = jax.block_until_ready(
        fn_f32(x, weight, gamma, beta, running_mean, running_var))
    assert out_f32.shape == (N, Cout, H, W)
    assert jnp.allclose(out_f32, ref, atol=1e-3, rtol=1e-3), "f32 mismatch"

    print("KERNEL_OK")
</pallas_src>

<mosaic_0001>
module attributes {stable_mosaic.version = 11 : i64} {
  func.func @_bn_conv_kernel(%arg0: i32, %arg1: i32, %arg2: i32, %arg3: memref<1x18x18x4xbf16, #tpu.memory_space<vmem>>, %arg4: memref<36x128xbf16, #tpu.memory_space<vmem>>, %arg5: memref<1x128xf32, #tpu.memory_space<vmem>>, %arg6: memref<1x128xf32, #tpu.memory_space<vmem>>, %arg7: memref<1x1x256x128xf32, #tpu.memory_space<vmem>>) attributes {dimension_semantics = [#tpu.dimension_semantics<parallel>, #tpu.dimension_semantics<parallel>, #tpu.dimension_semantics<parallel>], iteration_bounds = array<i64: 2, 1, 1>, scalar_prefetch = 0 : i64, scratch_operands = 0 : i64, tpu.core_type = #tpu.core_type<tc>, window_params = [{transform_indices = @transform_0, window_bounds = array<i64: 1, 18, 18, 4>}, {transform_indices = @transform_1, window_bounds = array<i64: 36, 128>}, {transform_indices = @transform_2, window_bounds = array<i64: 1, 128>}, {transform_indices = @transform_3, window_bounds = array<i64: 1, 128>}, {transform_indices = @transform_4, window_bounds = array<i64: 1, 1, 256, 128>}]} {
    %c16_i32 = arith.constant 16 : i32
    %0 = arith.muli %arg2, %c16_i32 : i32
    %c0_i32 = arith.constant 0 : i32
    %1 = arith.addi %0, %c0_i32 : i32
    %c0 = arith.constant 0 : index
    %2 = arith.index_cast %1 : i32 to index
    %c0_0 = arith.constant 0 : index
    %c0_1 = arith.constant 0 : index
    %3 = vector.load %arg3[%c0, %2, %c0_0, %c0_1] : memref<1x18x18x4xbf16, #tpu.memory_space<vmem>>, vector<1x16x18x4xbf16>
    %4 = vector.shape_cast %3 : vector<1x16x18x4xbf16> to vector<16x18x4xbf16>
    %5 = vector.extract_strided_slice %4 {offsets = [0, 0, 0], sizes = [16, 16, 4], strides = [1, 1, 1]} : vector<16x18x4xbf16> to vector<16x16x4xbf16>
    %6 = vector.extract_strided_slice %4 {offsets = [0, 1, 0], sizes = [16, 16, 4], strides = [1, 1, 1]} : vector<16x18x4xbf16> to vector<16x16x4xbf16>
    %7 = vector.extract_strided_slice %4 {offsets = [0, 2, 0], sizes = [16, 16, 4], strides = [1, 1, 1]} : vector<16x18x4xbf16> to vector<16x16x4xbf16>
    %c1_i32 = arith.constant 1 : i32
    %8 = arith.addi %0, %c1_i32 : i32
    %c0_2 = arith.constant 0 : index
    %9 = arith.index_cast %8 : i32 to index
    %c0_3 = arith.constant 0 : index
    %c0_4 = arith.constant 0 : index
    %10 = vector.load %arg3[%c0_2, %9, %c0_3, %c0_4] : memref<1x18x18x4xbf16, #tpu.memory_space<vmem>>, vector<1x16x18x4xbf16>
    %11 = vector.shape_cast %10 : vector<1x16x18x4xbf16> to vector<16x18x4xbf16>
    %12 = vector.extract_strided_slice %11 {offsets = [0, 0, 0], sizes = [16, 16, 4], strides = [1, 1, 1]} : vector<16x18x4xbf16> to vector<16x16x4xbf16>
    %13 = vector.extract_strided_slice %11 {offsets = [0, 1, 0], sizes = [16, 16, 4], strides = [1, 1, 1]} : vector<16x18x4xbf16> to vector<16x16x4xbf16>
    %14 = vector.extract_strided_slice %11 {offsets = [0, 2, 0], sizes = [16, 16, 4], strides = [1, 1, 1]} : vector<16x18x4xbf16> to vector<16x16x4xbf16>
    %c2_i32 = arith.constant 2 : i32
    %15 = arith.addi %0, %c2_i32 : i32
    %c0_5 = arith.constant 0 : index
    %16 = arith.index_cast %15 : i32 to index
    %c0_6 = arith.constant 0 : index
    %c0_7 = arith.constant 0 : index
    %17 = vector.load %arg3[%c0_5, %16, %c0_6, %c0_7] : memref<1x18x18x4xbf16, #tpu.memory_space<vmem>>, vector<1x16x18x4xbf16>
    %18 = vector.shape_cast %17 : vector<1x16x18x4xbf16> to vector<16x18x4xbf16>
    %19 = vector.extract_strided_slice %18 {offsets = [0, 0, 0], sizes = [16, 16, 4], strides = [1, 1, 1]} : vector<16x18x4xbf16> to vector<16x16x4xbf16>
    %20 = vector.extract_strided_slice %18 {offsets = [0, 1, 0], sizes = [16, 16, 4], strides = [1, 1, 1]} : vector<16x18x4xbf16> to vector<16x16x4xbf16>
    %21 = vector.extract_strided_slice %18 {offsets = [0, 2, 0], sizes = [16, 16, 4], strides = [1, 1, 1]} : vector<16x18x4xbf16> to vector<16x16x4xbf16>
    %22 = tpu.concatenate %5, %6, %7, %12, %13, %14, %19, %20, %21 in 2 : vector<16x16x4xbf16>, vector<16x16x4xbf16>, vector<16x16x4xbf16>, vector<16x16x4xbf16>, vector<16x16x4xbf16>, vector<16x16x4xbf16>, vector<16x16x4xbf16>, vector<16x16x4xbf16>, vector<16x16x4xbf16> -> vector<16x16x36xbf16>
    %23 = vector.shape_cast %22 : vector<16x16x36xbf16> to vector<256x36xbf16>
    %c0_8 = arith.constant 0 : index
    %c0_9 = arith.constant 0 : index
    %24 = vector.load %arg4[%c0_8, %c0_9] : memref<36x128xbf16, #tpu.memory_space<vmem>>, vector<36x128xbf16>
    %cst = arith.constant dense<0.000000e+00> : vector<256x128xf32>
    %25 = tpu.matmul %23, %24, %cst {dimension_numbers = #tpu.dot_dimension_numbers<[1], [0], [0], [1], [0, 0, 1, 1], [], []>} : vector<256x36xbf16>, vector<36x128xbf16>, vector<256x128xf32> -> vector<256x128xf32>
    %c0_10 = arith.constant 0 : index
    %c0_11 = arith.constant 0 : index
    %26 = vector.load %arg5[%c0_10, %c0_11] : memref<1x128xf32, #tpu.memory_space<vmem>>, vector<1x128xf32>
    %27 = vector.broadcast %26 : vector<1x128xf32> to vector<256x128xf32>
    %28 = arith.mulf %25, %27 : vector<256x128xf32>
    %c0_12 = arith.constant 0 : index
    %c0_13 = arith.constant 0 : index
    %29 = vector.load %arg6[%c0_12, %c0_13] : memref<1x128xf32, #tpu.memory_space<vmem>>, vector<1x128xf32>
    %30 = vector.broadcast %29 : vector<1x128xf32> to vector<256x128xf32>
    %31 = arith.addf %28, %30 : vector<256x128xf32>
    %cst_14 = arith.constant 0.000000e+00 : f32
    %32 = vector.broadcast %cst_14 : f32 to vector<256x128xf32>
    %33 = arith.maximumf %31, %32 : vector<256x128xf32>
    %c0_15 = arith.constant 0 : index
    %c0_16 = arith.constant 0 : index
    %c0_17 = arith.constant 0 : index
    %c0_18 = arith.constant 0 : index
    %34 = vector.load %arg7[%c0_15, %c0_16, %c0_17, %c0_18] : memref<1x1x256x128xf32, #tpu.memory_space<vmem>>, vector<1x1x256x128xf32>
    %35 = vector.shape_cast %34 : vector<1x1x256x128xf32> to vector<256x128xf32>
    %36 = vector.shape_cast %33 : vector<256x128xf32> to vector<1x1x256x128xf32>
    tpu.vector_store %arg7[%c0_15, %c0_16, %c0_17, %c0_18], %36 {strides = array<i32>} : memref<1x1x256x128xf32, #tpu.memory_space<vmem>>, vector<1x1x256x128xf32>,
    return
  }
  func.func @transform_0(%arg0: i32, %arg1: i32, %arg2: i32) -> (i32, i32, i32, i32) {
    %c0_i32 = arith.constant 0 : i32
    %c0_i32_0 = arith.constant 0 : i32
    %c0_i32_1 = arith.constant 0 : i32
    %c0_i32_2 = arith.constant 0 : i32
    return %arg0, %c0_i32, %c0_i32_0, %c0_i32_1 : i32, i32, i32, i32
  }
  func.func @transform_1(%arg0: i32, %arg1: i32, %arg2: i32) -> (i32, i32) {
    %c0_i32 = arith.constant 0 : i32
    %c0_i32_0 = arith.constant 0 : i32
    return %c0_i32, %arg1 : i32, i32
  }
  func.func @transform_2(%arg0: i32, %arg1: i32, %arg2: i32) -> (i32, i32) {
    %c0_i32 = arith.constant 0 : i32
    %c0_i32_0 = arith.constant 0 : i32
    return %c0_i32, %arg1 : i32, i32
  }
  func.func @transform_3(%arg0: i32, %arg1: i32, %arg2: i32) -> (i32, i32) {
    %c0_i32 = arith.constant 0 : i32
    %c0_i32_0 = arith.constant 0 : i32
    return %c0_i32, %arg1 : i32, i32
  }
  func.func @transform_4(%arg0: i32, %arg1: i32, %arg2: i32) -> (i32, i32, i32, i32) {
    %c0_i32 = arith.constant 0 : i32
    %c0_i32_0 = arith.constant 0 : i32
    return %arg0, %arg2, %c0_i32, %arg1 : i32, i32, i32, i32
  }
}

</mosaic_0001>

<llo_original>
// kernel: bn_conv2d.1
$region0: #{bn_conv2d.1}
  #allocation0 [shape = 'u32[]', space=smem, size = 0x4, offset = 0x4, fixed_abs, tag = 'smem constant byte address 0x4 - core index']
  #allocation1 [shape = 'u32[144,128]{1,0:T(1,128)}', space=vmem, size = 0x12000, scoped, tag = 'internal scratch']
  %s0 = inlined_call_operand.vmem [shape: bf16[2,18,18,4], index: 0, kind: input, shape index: {}]
  %s1 = inlined_call_operand.vmem [shape: bf16[36,128], index: 1, kind: input, shape index: {}]
  %s2 = inlined_call_operand.vmem [shape: f32[1,128], index: 2, kind: input, shape index: {}]
  %s3 = inlined_call_operand.vmem [shape: f32[1,128], index: 3, kind: input, shape index: {}]
  %s4 = inlined_call_operand.vmem [shape: f32[2,1,256,128], index: 4, kind: output, shape index: {}]
  %s5 = sld [smem:[#allocation0]]
  $region49: #{bn_conv2d.1} parent=0
    _
  %s7 = ssub.s32 1, %s5
  %s8 = scalar_select 0, %s7, %s5
  loop: start=0, step=1, limit=4
  $region2: #{bn_conv2d.1} parent=0 // loop_pre_header
    _
  $region3: #{bn_conv2d.1} parent=0 // loop_header
    %s10 = sphi 0, %s14
    %p11 = scmp.ge.s32.totalorder %s10, 4
    %s17 = sphi 0, %s36
    %s18 = sphi 0, %s32
    %s19 = sphi 0, %s28
    %s20 = sphi 0, %s17
    %s21 = sphi 0, %s18
    %s22 = sphi 0, %s19
    %s23 = sphi 0, %s20
    %s24 = sphi 0, %s21
    %s25 = sphi 0, %s22
    %s39 = sphi 0, %s41
    %s42 = sphi 0, %s39
    %s43 = sphi 0, %s42
    %s59 = sphi 0, %s43
    %s65 = sphi 0, %s67
    %s68 = sphi 0, %s65
    %s69 = sphi 0, %s68
    %s85 = sphi 0, %s69
    %s91 = sphi 0, %s93
    %s94 = sphi 0, %s91
    %s95 = sphi 0, %s94
    %s111 = sphi 0, %s95
    %s117 = sphi 0, %s119
    %s120 = sphi 0, %s117
    %s121 = sphi 0, %s120
    %s137 = sphi 0, %s121
    %s147 = sphi 0, %s149
    %s150 = sphi 0, %s147
    %s151 = sphi 0, %s150
    %s167 = sphi 0, %s151
  $region4: #{bn_conv2d.1} parent=0 // loop_header_branch
    %13 = sbr.rel (%p11) target = $region8
  $region5: #{bn_conv2d.1} parent=0 // loop_body
    %s15 = ssub.s32 %s10, 1
    %s16 = ssub.s32 %s10, 2
    %s26 = sadd.s32 1, %s19
    %p27 = scmp.ge.s32.totalorder %s26, 1
    %s28 = scalar_select %p27, 0, %s26
    %s29 = sadd.s32 1, %s18
    %s30 = scalar_select %p27, %s29, %s18
    %p31 = scmp.ge.s32.totalorder %s30, 1
    %s32 = scalar_select %p31, 0, %s30
    %s33 = sadd.s32 1, %s17
    %s34 = scalar_select %p31, %s33, %s17
    %p35 = scmp.ge.s32.totalorder %s34, 2
    %s36 = scalar_select %p35, 0, %s34
    %s37 = ssub.s32 %s17, %s36
    %p38 = scmp.eq.s32.totalorder %s37, 0
    %s40 = sadd.s32 %s39, 1
    %s41 = scalar_select %p38, %s39, %s40
    %p44 = pneg %p38
    %p45 = scmp.eq.s32.totalorder %s10, 1
    %p46 = por %p44, %p45
    %p47 = scmp.ne.s32.totalorder %s39, %s42
    %p48 = scmp.eq.s32.totalorder %s10, 0
    %p49 = por %p47, %p48
    %p50 = scmp.ne.s32.totalorder %s39, %s42
    %p51 = scmp.eq.s32.totalorder %s15, 1
    %p52 = por %p50, %p51
    %p53 = scmp.ne.s32.totalorder %s42, %s43
    %p54 = scmp.eq.s32.totalorder %s15, 0
    %p55 = por %p53, %p54
    %p56 = scmp.ne.s32.totalorder %s42, %s43
    %p57 = scmp.eq.s32.totalorder %s16, 1
    %p58 = por %p56, %p57
    %p60 = scmp.ne.s32.totalorder %s43, %s59
    %p61 = scmp.eq.s32.totalorder %s16, 0
    %p62 = por %p60, %p61
    %s63 = ssub.s32 %s18, %s32
    %p64 = scmp.eq.s32.totalorder %s63, 0
    %s66 = sadd.s32 %s65, 1
    %s67 = scalar_select %p64, %s65, %s66
    %p70 = pneg %p64
    %p71 = scmp.eq.s32.totalorder %s10, 1
    %p72 = por %p70, %p71
    %p73 = scmp.ne.s32.totalorder %s65, %s68
    %p74 = scmp.eq.s32.totalorder %s10, 0
    %p75 = por %p73, %p74
    %p76 = scmp.ne.s32.totalorder %s65, %s68
    %p77 = scmp.eq.s32.totalorder %s15, 1
    %p78 = por %p76, %p77
    %p79 = scmp.ne.s32.totalorder %s68, %s69
    %p80 = scmp.eq.s32.totalorder %s15, 0
    %p81 = por %p79, %p80
    %p82 = scmp.ne.s32.totalorder %s68, %s69
    %p83 = scmp.eq.s32.totalorder %s16, 1
    %p84 = por %p82, %p83
    %p86 = scmp.ne.s32.totalorder %s69, %s85
    %p87 = scmp.eq.s32.totalorder %s16, 0
    %p88 = por %p86, %p87
    %s89 = ssub.s32 %s18, %s32
    %p90 = scmp.eq.s32.totalorder %s89, 0
    %s92 = sadd.s32 %s91, 1
    %s93 = scalar_select %p90, %s91, %s92
    %p96 = pneg %p90
    %p97 = scmp.eq.s32.totalorder %s10, 1
    %p98 = por %p96, %p97
    %p99 = scmp.ne.s32.totalorder %s91, %s94
    %p100 = scmp.eq.s32.totalorder %s10, 0
    %p101 = por %p99, %p100
    %p102 = scmp.ne.s32.totalorder %s91, %s94
    %p103 = scmp.eq.s32.totalorder %s15, 1
    %p104 = por %p102, %p103
    %p105 = scmp.ne.s32.totalorder %s94, %s95
    %p106 = scmp.eq.s32.totalorder %s15, 0
    %p107 = por %p105, %p106
    %p108 = scmp.ne.s32.totalorder %s94, %s95
    %p109 = scmp.eq.s32.totalorder %s16, 1
    %p110 = por %p108, %p109
    %p112 = scmp.ne.s32.totalorder %s95, %s111
    %p113 = scmp.eq.s32.totalorder %s16, 0
    %p114 = por %p112, %p113
    %s115 = ssub.s32 %s18, %s32
    %p116 = scmp.eq.s32.totalorder %s115, 0
    %s118 = sadd.s32 %s117, 1
    %s119 = scalar_select %p116, %s117, %s118
    %p122 = pneg %p116
    %p123 = scmp.eq.s32.totalorder %s10, 1
    %p124 = por %p122, %p123
    %p125 = scmp.ne.s32.totalorder %s117, %s120
    %p126 = scmp.eq.s32.totalorder %s10, 0
    %p127 = por %p125, %p126
    %p128 = scmp.ne.s32.totalorder %s117, %s120
    %p129 = scmp.eq.s32.totalorder %s15, 1
    %p130 = por %p128, %p129
    %p131 = scmp.ne.s32.totalorder %s120, %s121
    %p132 = scmp.eq.s32.totalorder %s15, 0
    %p133 = por %p131, %p132
    %p134 = scmp.ne.s32.totalorder %s120, %s121
    %p135 = scmp.eq.s32.totalorder %s16, 1
    %p136 = por %p134, %p135
    %p138 = scmp.ne.s32.totalorder %s121, %s137
    %p139 = scmp.eq.s32.totalorder %s16, 0
    %p140 = por %p138, %p139
    %s141 = ssub.s32 %s17, %s36
    %s142 = ssub.s32 %s19, %s28
    %s143 = sor.u32 %s141, %s142
    %s144 = ssub.s32 %s18, %s32
    %s145 = sor.u32 %s143, %s144
    %p146 = scmp.eq.s32.totalorder %s145, 0
    %s148 = sadd.s32 %s147, 1
    %s149 = scalar_select %p146, %s147, %s148
    %p152 = pneg %p146
    %p153 = scmp.eq.s32.totalorder %s10, 1
    %p154 = por %p152, %p153
    %p155 = scmp.ne.s32.totalorder %s147, %s150
    %p156 = scmp.eq.s32.totalorder %s10, 0
    %p157 = por %p155, %p156
    %p158 = scmp.ne.s32.totalorder %s147, %s150
    %p159 = scmp.eq.s32.totalorder %s15, 1
    %p160 = por %p158, %p159
    %p161 = scmp.ne.s32.totalorder %s150, %s151
    %p162 = scmp.eq.s32.totalorder %s15, 0
    %p163 = por %p161, %p162
    %p164 = scmp.ne.s32.totalorder %s150, %s151
    %p165 = scmp.eq.s32.totalorder %s16, 1
    %p166 = por %p164, %p165
    %p168 = scmp.ne.s32.totalorder %s151, %s167
    %p169 = scmp.eq.s32.totalorder %s16, 0
    %p170 = por %p168, %p169
    %p171 = scmp.le.s32.totalorder 1, %s10
    %p172 = scmp.lt.s32.totalorder %s10, 3
    %p173 = pnand %p171, %p172
    %p174 = pneg %p173
    // Predicated region
    $region9: #{bn_conv2d.1} parent=5 // pred_check
      _
    $region10: #{bn_conv2d.1} parent=5 // pred_check_branch
      %176 = sbr.rel (%p173) target = $region12
    $region11: #{bn_conv2d.1} parent=5 // pred_region
      %s177 = ssub.s32 %s10, 1
      // Predicated region
      $region13: #{bn_conv2d.1} parent=11 // pred_check
        %p178 = pneg %p81
      $region14: #{bn_conv2d.1} parent=11 // pred_check_branch
        %180 = sbr.rel (%p178) target = $region16
      $region15: #{bn_conv2d.1} parent=11 // pred_region
        %p181 = scmp.lt.s32.totalorder %s21, 0
        %s182 = scalar_select %p181, %s21, 0
        %s183 = smul.addr %s182, 4
        %s184 = scalar_lea.vmem %s1, %s183
      $region16: #{bn_conv2d.1} parent=11 // pred_fallthru
        _
      // Predicated region
      $region17: #{bn_conv2d.1} parent=11 // pred_check
        %p185 = pneg %p107
      $region18: #{bn_conv2d.1} parent=11 // pred_check_branch
        %187 = sbr.rel (%p185) target = $region20
      $region19: #{bn_conv2d.1} parent=11 // pred_region
        %p188 = scmp.lt.s32.totalorder %s21, 0
        %s189 = scalar_select %p188, %s21, 0
        %s190 = scalar_lea.vmem %s2, %s189
      $region20: #{bn_conv2d.1} parent=11 // pred_fallthru
        _
      // Predicated region
      $region21: #{bn_conv2d.1} parent=11 // pred_check
        %p191 = pneg %p133
      $region22: #{bn_conv2d.1} parent=11 // pred_check_branch
        %193 = sbr.rel (%p191) target = $region24
      $region23: #{bn_conv2d.1} parent=11 // pred_region
        %p194 = scmp.lt.s32.totalorder %s21, 0
        %s195 = scalar_select %p194, %s21, 0
        %s196 = scalar_lea.vmem %s3, %s195
      $region24: #{bn_conv2d.1} parent=11 // pred_fallthru
        _
    $region12: #{bn_conv2d.1} parent=5 // pred_fallthru
      _
    %p197 = scmp.lt.s32.totalorder %s10, 2
    // Predicated region
    $region25: #{bn_conv2d.1} parent=5 // pred_check
      %p198 = pneg %p197
    $region26: #{bn_conv2d.1} parent=5 // pred_check_branch
      %200 = sbr.rel (%p198) target = $region28
    $region27: #{bn_conv2d.1} parent=5 // pred_region
      // Predicated region
      $region29: #{bn_conv2d.1} parent=27 // pred_check
        %p201 = pneg %p49
      $region30: #{bn_conv2d.1} parent=27 // pred_check_branch
        %203 = sbr.rel (%p201) target = $region32
      $region31: #{bn_conv2d.1} parent=27 // pred_region
        %p204 = scmp.lt.s32.totalorder %s17, 1
        %s205 = scalar_select %p204, %s17, 1
        %s206 = smul.addr %s205, 54
        %s207 = smul.addr %s206, 4
        %s208 = scalar_lea.vmem %s0, %s207
      $region32: #{bn_conv2d.1} parent=27 // pred_fallthru
        _
    $region28: #{bn_conv2d.1} parent=5 // pred_fallthru
      _
    %p209 = scmp.le.s32.totalorder 1, %s10
    %p210 = scmp.lt.s32.totalorder %s10, 3
    %p211 = pnand %p209, %p210
    %p212 = pneg %p211
    // Predicated region
    $region33: #{bn_conv2d.1} parent=5 // pred_check
      _
    $region34: #{bn_conv2d.1} parent=5 // pred_check_branch
      %214 = sbr.rel (%p211) target = $region36
    $region35: #{bn_conv2d.1} parent=5 // pred_region
      %s215 = ssub.s32 %s10, 1
      %p216 = scmp.lt.s32.totalorder %s20, 1
      %s217 = scalar_select %p216, %s20, 1
      %s218 = smul.addr %s217, 54
      %s219 = smul.addr %s218, 4
      %s220 = scalar_lea.vmem %s0, %s219
      %p221 = pneg %p55
      %p222 = pneg %p52
      %p223 = scmp.lt.s32.totalorder %s21, 0
      %s224 = scalar_select %p223, %s21, 0
      %s225 = smul.addr %s224, 4
      %s226 = scalar_lea.vmem %s1, %s225
      %p227 = pneg %p81
      %p228 = pneg %p78
      %p229 = scmp.lt.s32.totalorder %s21, 0
      %s230 = scalar_select %p229, %s21, 0
      %s231 = scalar_lea.vmem %s2, %s230
      %p232 = pneg %p107
      %p233 = pneg %p104
      %p234 = scmp.lt.s32.totalorder %s21, 0
      %s235 = scalar_select %p234, %s21, 0
      %s236 = scalar_lea.vmem %s3, %s235
      %p237 = pneg %p133
      %p238 = pneg %p130
      %p239 = pneg %p163
      %p240 = pneg %p160
      %p241 = scmp.lt.s32.totalorder %s20, 1
      %s242 = scalar_select %p241, %s20, 1
      %p243 = scmp.lt.s32.totalorder %s22, 0
      %s244 = scalar_select %p243, %s22, 0
      %p245 = scmp.lt.s32.totalorder %s21, 0
      %s246 = scalar_select %p245, %s21, 0
      %s247 = smul.addr %s244, 32
      %s248 = sadd.s32 %s246, %s247
      %s249 = smul.addr %s242, 32
      %s250 = sadd.s32 %s248, %s249
      %s251 = smul.addr %s250, 8
      %s252 = scalar_lea.vmem %s4, %s251
      %p253 = scmp.lt.s32.totalorder %s20, 1
      %s254 = scalar_select %p253, %s20, 1
      %s255 = smul.addr %s254, 54
      %s256 = smul.addr %s255, 4
      %s257 = scalar_lea.vmem %s0, %s256
      %p258 = scmp.lt.s32.totalorder %s21, 0
      %s259 = scalar_select %p258, %s21, 0
      %s260 = smul.addr %s259, 4
      %s261 = scalar_lea.vmem %s1, %s260
      %p262 = scmp.lt.s32.totalorder %s21, 0
      %s263 = scalar_select %p262, %s21, 0
      %s264 = scalar_lea.vmem %s2, %s263
      %p265 = scmp.lt.s32.totalorder %s21, 0
      %s266 = scalar_select %p265, %s21, 0
      %s267 = scalar_lea.vmem %s3, %s266
      %p268 = scmp.lt.s32.totalorder %s20, 1
      %s269 = scalar_select %p268, %s20, 1
      %p270 = scmp.lt.s32.totalorder %s22, 0
      %s271 = scalar_select %p270, %s22, 0
      %p272 = scmp.lt.s32.totalorder %s21, 0
      %s273 = scalar_select %p272, %s21, 0
      %s274 = smul.addr %s271, 32
      %s275 = sadd.s32 %s273, %s274
      %s276 = smul.addr %s269, 32
      %s277 = sadd.s32 %s275, %s276
      %s278 = smul.addr %s277, 8
      %s279 = scalar_lea.vmem %s4, %s278
      %s281 = smul.u32 %s22, 16
      %s282 = smul.u32 %s281, 3
      %s283 = smul.addr %s282, 4
      %s284 = scalar_lea.vmem %s257, %s283
      %v285 = vld [vmem:[%s284] sm:$0xf]
      %v286 = vld [vmem:[%s284 + $0x4] sm:$0xf]
      %v287 = vld [vmem:[%s284 + $0x8] sm:$0x1]
      %v288 = vld [vmem:[%s284 + $0xc] sm:$0xf]
      %v289 = vld [vmem:[%s284 + $0x10] sm:$0xf]
      %v290 = vld [vmem:[%s284 + $0x14] sm:$0x1]
      %v291 = vld [vmem:[%s284 + $0x18] sm:$0xf]
      %v292 = vld [vmem:[%s284 + $0x1c] sm:$0xf]
      %v293 = vld [vmem:[%s284 + $0x20] sm:$0x1]
      %v294 = vld [vmem:[%s284 + $0x24] sm:$0xf]
      %v295 = vld [vmem:[%s284 + $0x28] sm:$0xf]
      %v296 = vld [vmem:[%s284 + $0x2c] sm:$0x1]
      %v297 = vld [vmem:[%s284 + $0x30] sm:$0xf]
      %v298 = vld [vmem:[%s284 + $0x34] sm:$0xf]
      %v299 = vld [vmem:[%s284 + $0x38] sm:$0x1]
      %v300 = vld [vmem:[%s284 + $0x3c] sm:$0xf]
      %v301 = vld [vmem:[%s284 + $0x40] sm:$0xf]
      %v302 = vld [vmem:[%s284 + $0x44] sm:$0x1]
      %v303 = vld [vmem:[%s284 + $0x48] sm:$0xf]
      %v304 = vld [vmem:[%s284 + $0x4c] sm:$0xf]
      %v305 = vld [vmem:[%s284 + $0x50] sm:$0x1]
      %v306 = vld [vmem:[%s284 + $0x54] sm:$0xf]
      %v307 = vld [vmem:[%s284 + $0x58] sm:$0xf]
      %v308 = vld [vmem:[%s284 + $0x5c] sm:$0x1]
      %v309 = vld [vmem:[%s284 + $0x60] sm:$0xf]
      %v310 = vld [vmem:[%s284 + $0x64] sm:$0xf]
      %v311 = vld [vmem:[%s284 + $0x68] sm:$0x1]
      %v312 = vld [vmem:[%s284 + $0x6c] sm:$0xf]
      %v313 = vld [vmem:[%s284 + $0x70] sm:$0xf]
      %v314 = vld [vmem:[%s284 + $0x74] sm:$0x1]
      %v315 = vld [vmem:[%s284 + $0x78] sm:$0xf]
      %v316 = vld [vmem:[%s284 + $0x7c] sm:$0xf]
      %v317 = vld [vmem:[%s284 + $0x80] sm:$0x1]
      %v318 = vld [vmem:[%s284 + $0x84] sm:$0xf]
      %v319 = vld [vmem:[%s284 + $0x88] sm:$0xf]
      %v320 = vld [vmem:[%s284 + $0x8c] sm:$0x1]
      %v321 = vld [vmem:[%s284 + $0x90] sm:$0xf]
      %v322 = vld [vmem:[%s284 + $0x94] sm:$0xf]
      %v323 = vld [vmem:[%s284 + $0x98] sm:$0x1]
      %v324 = vld [vmem:[%s284 + $0x9c] sm:$0xf]
      %v325 = vld [vmem:[%s284 + $0xa0] sm:$0xf]
      %v326 = vld [vmem:[%s284 + $0xa4] sm:$0x1]
      %v327 = vld [vmem:[%s284 + $0xa8] sm:$0xf]
      %v328 = vld [vmem:[%s284 + $0xac] sm:$0xf]
      %v329 = vld [vmem:[%s284 + $0xb0] sm:$0x1]
      %v330 = vld [vmem:[%s284 + $0xb4] sm:$0xf]
      %v331 = vld [vmem:[%s284 + $0xb8] sm:$0xf]
      %v332 = vld [vmem:[%s284 + $0xbc] sm:$0x1]
      %s333 = sadd.s32 %s281, 1
      %s334 = smul.u32 %s333, 3
      %s335 = smul.addr %s334, 4
      %s336 = scalar_lea.vmem %s257, %s335
      %v337 = vld [vmem:[%s336] sm:$0xf]
      %v338 = vld [vmem:[%s336 + $0x4] sm:$0xf]
      %v339 = vld [vmem:[%s336 + $0x8] sm:$0x1]
      %v340 = vld [vmem:[%s336 + $0xc] sm:$0xf]
      %v341 = vld [vmem:[%s336 + $0x10] sm:$0xf]
      %v342 = vld [vmem:[%s336 + $0x14] sm:$0x1]
      %v343 = vld [vmem:[%s336 + $0x18] sm:$0xf]
      %v344 = vld [vmem:[%s336 + $0x1c] sm:$0xf]
      %v345 = vld [vmem:[%s336 + $0x20] sm:$0x1]
      %v346 = vld [vmem:[%s336 + $0x24] sm:$0xf]
      %v347 = vld [vmem:[%s336 + $0x28] sm:$0xf]
      %v348 = vld [vmem:[%s336 + $0x2c] sm:$0x1]
      %v349 = vld [vmem:[%s336 + $0x30] sm:$0xf]
      %v350 = vld [vmem:[%s336 + $0x34] sm:$0xf]
      %v351 = vld [vmem:[%s336 + $0x38] sm:$0x1]
      %v352 = vld [vmem:[%s336 + $0x3c] sm:$0xf]
      %v353 = vld [vmem:[%s336 + $0x40] sm:$0xf]
      %v354 = vld [vmem:[%s336 + $0x44] sm:$0x1]
      %v355 = vld [vmem:[%s336 + $0x48] sm:$0xf]
      %v356 = vld [vmem:[%s336 + $0x4c] sm:$0xf]
      %v357 = vld [vmem:[%s336 + $0x50] sm:$0x1]
      %v358 = vld [vmem:[%s336 + $0x54] sm:$0xf]
      %v359 = vld [vmem:[%s336 + $0x58] sm:$0xf]
      %v360 = vld [vmem:[%s336 + $0x5c] sm:$0x1]
      %v361 = vld [vmem:[%s336 + $0x60] sm:$0xf]
      %v362 = vld [vmem:[%s336 + $0x64] sm:$0xf]
      %v363 = vld [vmem:[%s336 + $0x68] sm:$0x1]
      %v364 = vld [vmem:[%s336 + $0x6c] sm:$0xf]
      %v365 = vld [vmem:[%s336 + $0x70] sm:$0xf]
      %v366 = vld [vmem:[%s336 + $0x74] sm:$0x1]
      %v367 = vld [vmem:[%s336 + $0x78] sm:$0xf]
      %v368 = vld [vmem:[%s336 + $0x7c] sm:$0xf]
      %v369 = vld [vmem:[%s336 + $0x80] sm:$0x1]
      %v370 = vld [vmem:[%s336 + $0x84] sm:$0xf]
      %v371 = vld [vmem:[%s336 + $0x88] sm:$0xf]
      %v372 = vld [vmem:[%s336 + $0x8c] sm:$0x1]
      %v373 = vld [vmem:[%s336 + $0x90] sm:$0xf]
      %v374 = vld [vmem:[%s336 + $0x94] sm:$0xf]
      %v375 = vld [vmem:[%s336 + $0x98] sm:$0x1]
      %v376 = vld [vmem:[%s336 + $0x9c] sm:$0xf]
      %v377 = vld [vmem:[%s336 + $0xa0] sm:$0xf]
      %v378 = vld [vmem:[%s336 + $0xa4] sm:$0x1]
      %v379 = vld [vmem:[%s336 + $0xa8] sm:$0xf]
      %v380 = vld [vmem:[%s336 + $0xac] sm:$0xf]
      %v381 = vld [vmem:[%s336 + $0xb0] sm:$0x1]
      %v382 = vld [vmem:[%s336 + $0xb4] sm:$0xf]
      %v383 = vld [vmem:[%s336 + $0xb8] sm:$0xf]
      %v384 = vld [vmem:[%s336 + $0xbc] sm:$0x1]
      %s385 = sadd.s32 %s281, 2
      %s386 = smul.u32 %s385, 3
      %s387 = smul.addr %s386, 4
      %s388 = scalar_lea.vmem %s257, %s387
      %v389 = vld [vmem:[%s388] sm:$0xf]
      %v390 = vld [vmem:[%s388 + $0x4] sm:$0xf]
      %v391 = vld [vmem:[%s388 + $0x8] sm:$0x1]
      %v392 = vld [vmem:[%s388 + $0xc] sm:$0xf]
      %v393 = vld [vmem:[%s388 + $0x10] sm:$0xf]
      %v394 = vld [vmem:[%s388 + $0x14] sm:$0x1]
      %v395 = vld [vmem:[%s388 + $0x18] sm:$0xf]
      %v396 = vld [vmem:[%s388 + $0x1c] sm:$0xf]
      %v397 = vld [vmem:[%s388 + $0x20] sm:$0x1]
      %v398 = vld [vmem:[%s388 + $0x24] sm:$0xf]
      %v399 = vld [vmem:[%s388 + $0x28] sm:$0xf]
      %v400 = vld [vmem:[%s388 + $0x2c] sm:$0x1]
      %v401 = vld [vmem:[%s388 + $0x30] sm:$0xf]
      %v402 = vld [vmem:[%s388 + $0x34] sm:$0xf]
      %v403 = vld [vmem:[%s388 + $0x38] sm:$0x1]
      %v404 = vld [vmem:[%s388 + $0x3c] sm:$0xf]
      %v405 = vld [vmem:[%s388 + $0x40] sm:$0xf]
      %v406 = vld [vmem:[%s388 + $0x44] sm:$0x1]
      %v407 = vld [vmem:[%s388 + $0x48] sm:$0xf]
      %v408 = vld [vmem:[%s388 + $0x4c] sm:$0xf]
      %v409 = vld [vmem:[%s388 + $0x50] sm:$0x1]
      %v410 = vld [vmem:[%s388 + $0x54] sm:$0xf]
      %v411 = vld [vmem:[%s388 + $0x58] sm:$0xf]
      %v412 = vld [vmem:[%s388 + $0x5c] sm:$0x1]
      %v413 = vld [vmem:[%s388 + $0x60] sm:$0xf]
      %v414 = vld [vmem:[%s388 + $0x64] sm:$0xf]
      %v415 = vld [vmem:[%s388 + $0x68] sm:$0x1]
      %v416 = vld [vmem:[%s388 + $0x6c] sm:$0xf]
      %v417 = vld [vmem:[%s388 + $0x70] sm:$0xf]
      %v418 = vld [vmem:[%s388 + $0x74] sm:$0x1]
      %v419 = vld [vmem:[%s388 + $0x78] sm:$0xf]
      %v420 = vld [vmem:[%s388 + $0x7c] sm:$0xf]
      %v421 = vld [vmem:[%s388 + $0x80] sm:$0x1]
      %v422 = vld [vmem:[%s388 + $0x84] sm:$0xf]
      %v423 = vld [vmem:[%s388 + $0x88] sm:$0xf]
      %v424 = vld [vmem:[%s388 + $0x8c] sm:$0x1]
      %v425 = vld [vmem:[%s388 + $0x90] sm:$0xf]
      %v426 = vld [vmem:[%s388 + $0x94] sm:$0xf]
      %v427 = vld [vmem:[%s388 + $0x98] sm:$0x1]
      %v428 = vld [vmem:[%s388 + $0x9c] sm:$0xf]
      %v429 = vld [vmem:[%s388 + $0xa0] sm:$0xf]
      %v430 = vld [vmem:[%s388 + $0xa4] sm:$0x1]
      %v431 = vld [vmem:[%s388 + $0xa8] sm:$0xf]
      %v432 = vld [vmem:[%s388 + $0xac] sm:$0xf]
      %v433 = vld [vmem:[%s388 + $0xb0] sm:$0x1]
      %v434 = vld [vmem:[%s388 + $0xb4] sm:$0xf]
      %v435 = vld [vmem:[%s388 + $0xb8] sm:$0xf]
      %v436 = vld [vmem:[%s388 + $0xbc] sm:$0x1]
      %v469 = vunpack.c.l.b16 %v285
      %v470 = vunpack.c.l.b16 %v286
      %v471 = vunpack.c.l.b16 %v288
      %v472 = vunpack.c.l.b16 %v289
      %v473 = vunpack.c.l.b16 %v291
      %v474 = vunpack.c.l.b16 %v292
      %v475 = vunpack.c.l.b16 %v294
      %v476 = vunpack.c.l.b16 %v295
      %v477 = vunpack.c.l.b16 %v297
      %v478 = vunpack.c.l.b16 %v298
      %v479 = vunpack.c.l.b16 %v300
      %v480 = vunpack.c.l.b16 %v301
      %v481 = vunpack.c.l.b16 %v303
      %v482 = vunpack.c.l.b16 %v304
      %v483 = vunpack.c.l.b16 %v306
      %v484 = vunpack.c.l.b16 %v307
      %v485 = vunpack.c.l.b16 %v309
      %v486 = vunpack.c.l.b16 %v310
      %v487 = vunpack.c.l.b16 %v312
      %v488 = vunpack.c.l.b16 %v313
      %v489 = vunpack.c.l.b16 %v315
      %v490 = vunpack.c.l.b16 %v316
      %v491 = vunpack.c.l.b16 %v318
      %v492 = vunpack.c.l.b16 %v319
      %v493 = vunpack.c.l.b16 %v321
      %v494 = vunpack.c.l.b16 %v322
      %v495 = vunpack.c.l.b16 %v324
      %v496 = vunpack.c.l.b16 %v325
      %v497 = vunpack.c.l.b16 %v327
      %v498 = vunpack.c.l.b16 %v328
      %v499 = vunpack.c.l.b16 %v330
      %v500 = vunpack.c.l.b16 %v331
      %v501 = vpack.c.b16 %v470, %v469
      %v502 = vpack.c.b16 %v472, %v471
      %v503 = vpack.c.b16 %v474, %v473
      %v504 = vpack.c.b16 %v476, %v475
      %v505 = vpack.c.b16 %v478, %v477
      %v506 = vpack.c.b16 %v480, %v479
      %v507 = vpack.c.b16 %v482, %v481
      %v508 = vpack.c.b16 %v484, %v483
      %v509 = vpack.c.b16 %v486, %v485
      %v510 = vpack.c.b16 %v488, %v487
      %v511 = vpack.c.b16 %v490, %v489
      %v512 = vpack.c.b16 %v492, %v491
      %v513 = vpack.c.b16 %v494, %v493
      %v514 = vpack.c.b16 %v496, %v495
      %v515 = vpack.c.b16 %v498, %v497
      %v516 = vpack.c.b16 %v500, %v499
      %v533 = vunpack.c.l.b16 %v287
      %v534 = vunpack.c.l.b16 %v290
      %v535 = vunpack.c.l.b16 %v293
      %v536 = vunpack.c.l.b16 %v296
      %v537 = vunpack.c.l.b16 %v299
      %v538 = vunpack.c.l.b16 %v302
      %v539 = vunpack.c.l.b16 %v305
      %v540 = vunpack.c.l.b16 %v308
      %v541 = vunpack.c.l.b16 %v311
      %v542 = vunpack.c.l.b16 %v314
      %v543 = vunpack.c.l.b16 %v317
      %v544 = vunpack.c.l.b16 %v320
      %v545 = vunpack.c.l.b16 %v323
      %v546 = vunpack.c.l.b16 %v326
      %v547 = vunpack.c.l.b16 %v329
      %v548 = vunpack.c.l.b16 %v332
      %v549 = vpack.c.b16 %v533, %v533
      %v550 = vpack.c.b16 %v534, %v534
      %v551 = vpack.c.b16 %v535, %v535
      %v552 = vpack.c.b16 %v536, %v536
      %v553 = vpack.c.b16 %v537, %v537
      %v554 = vpack.c.b16 %v538, %v538
      %v555 = vpack.c.b16 %v539, %v539
      %v556 = vpack.c.b16 %v540, %v540
      %v557 = vpack.c.b16 %v541, %v541
      %v558 = vpack.c.b16 %v542, %v542
      %v559 = vpack.c.b16 %v543, %v543
      %v560 = vpack.c.b16 %v544, %v544
      %v561 = vpack.c.b16 %v545, %v545
      %v562 = vpack.c.b16 %v546, %v546
      %v563 = vpack.c.b16 %v547, %v547
      %v564 = vpack.c.b16 %v548, %v548
      %vm565 = vsmask.f32 7424
      %v567 = vshrl.u32 %v501, 16
      %v569 = vshll.u32 %v501, 16
      %v571 = vrot.slane %v569, 1
      %v572 = vor.u32 %v567, %v571
      %v574 = vshll.u32 %v549, 16
      %v576 = vrot.slane %v574, 1
      %v577 = vsel %vm565, %v572, %v576
      %v579 = vshrl.u32 %v502, 16
      %v581 = vshll.u32 %v502, 16
      %v583 = vrot.slane %v581, 1
      %v584 = vor.u32 %v579, %v583
      %v586 = vshll.u32 %v550, 16
      %v588 = vrot.slane %v586, 1
      %v589 = vsel %vm565, %v584, %v588
      %v591 = vshrl.u32 %v503, 16
      %v593 = vshll.u32 %v503, 16
      %v595 = vrot.slane %v593, 1
      %v596 = vor.u32 %v591, %v595
      %v598 = vshll.u32 %v551, 16
      %v600 = vrot.slane %v598, 1
      %v601 = vsel %vm565, %v596, %v600
      %v603 = vshrl.u32 %v504, 16
      %v605 = vshll.u32 %v504, 16
      %v607 = vrot.slane %v605, 1
      %v608 = vor.u32 %v603, %v607
      %v610 = vshll.u32 %v552, 16
      %v612 = vrot.slane %v610, 1
      %v613 = vsel %vm565, %v608, %v612
      %v615 = vshrl.u32 %v505, 16
      %v617 = vshll.u32 %v505, 16
      %v619 = vrot.slane %v617, 1
      %v620 = vor.u32 %v615, %v619
      %v622 = vshll.u32 %v553, 16
      %v624 = vrot.slane %v622, 1
      %v625 = vsel %vm565, %v620, %v624
      %v627 = vshrl.u32 %v506, 16
      %v629 = vshll.u32 %v506, 16
      %v631 = vrot.slane %v629, 1
      %v632 = vor.u32 %v627, %v631
      %v634 = vshll.u32 %v554, 16
      %v636 = vrot.slane %v634, 1
      %v637 = vsel %vm565, %v632, %v636
      %v639 = vshrl.u32 %v507, 16
      %v641 = vshll.u32 %v507, 16
      %v643 = vrot.slane %v641, 1
      %v644 = vor.u32 %v639, %v643
      %v646 = vshll.u32 %v555, 16
      %v648 = vrot.slane %v646, 1
      %v649 = vsel %vm565, %v644, %v648
      %v651 = vshrl.u32 %v508, 16
      %v653 = vshll.u32 %v508, 16
      %v655 = vrot.slane %v653, 1
      %v656 = vor.u32 %v651, %v655
      %v658 = vshll.u32 %v556, 16
      %v660 = vrot.slane %v658, 1
      %v661 = vsel %vm565, %v656, %v660
      %v663 = vshrl.u32 %v509, 16
      %v665 = vshll.u32 %v509, 16
      %v667 = vrot.slane %v665, 1
      %v668 = vor.u32 %v663, %v667
      %v670 = vshll.u32 %v557, 16
      %v672 = vrot.slane %v670, 1
      %v673 = vsel %vm565, %v668, %v672
      %v675 = vshrl.u32 %v510, 16
      %v677 = vshll.u32 %v510, 16
      %v679 = vrot.slane %v677, 1
      %v680 = vor.u32 %v675, %v679
      %v682 = vshll.u32 %v558, 16
      %v684 = vrot.slane %v682, 1
      %v685 = vsel %vm565, %v680, %v684
      %v687 = vshrl.u32 %v511, 16
      %v689 = vshll.u32 %v511, 16
      %v691 = vrot.slane %v689, 1
      %v692 = vor.u32 %v687, %v691
      %v694 = vshll.u32 %v559, 16
      %v696 = vrot.slane %v694, 1
      %v697 = vsel %vm565, %v692, %v696
      %v699 = vshrl.u32 %v512, 16
      %v701 = vshll.u32 %v512, 16
      %v703 = vrot.slane %v701, 1
      %v704 = vor.u32 %v699, %v703
      %v706 = vshll.u32 %v560, 16
      %v708 = vrot.slane %v706, 1
      %v709 = vsel %vm565, %v704, %v708
      %v711 = vshrl.u32 %v513, 16
      %v713 = vshll.u32 %v513, 16
      %v715 = vrot.slane %v713, 1
      %v716 = vor.u32 %v711, %v715
      %v718 = vshll.u32 %v561, 16
      %v720 = vrot.slane %v718, 1
      %v721 = vsel %vm565, %v716, %v720
      %v723 = vshrl.u32 %v514, 16
      %v725 = vshll.u32 %v514, 16
      %v727 = vrot.slane %v725, 1
      %v728 = vor.u32 %v723, %v727
      %v730 = vshll.u32 %v562, 16
      %v732 = vrot.slane %v730, 1
      %v733 = vsel %vm565, %v728, %v732
      %v735 = vshrl.u32 %v515, 16
      %v737 = vshll.u32 %v515, 16
      %v739 = vrot.slane %v737, 1
      %v740 = vor.u32 %v735, %v739
      %v742 = vshll.u32 %v563, 16
      %v744 = vrot.slane %v742, 1
      %v745 = vsel %vm565, %v740, %v744
      %v747 = vshrl.u32 %v516, 16
      %v749 = vshll.u32 %v516, 16
      %v751 = vrot.slane %v749, 1
      %v752 = vor.u32 %v747, %v751
      %v754 = vshll.u32 %v564, 16
      %v756 = vrot.slane %v754, 1
      %v757 = vsel %vm565, %v752, %v756
      %758 = vrot.lane.b32.xlu0 %v577, 4
      %v759 = vpop.permute.xlu0 %758
      %760 = vrot.lane.b32.xlu0 %v589, 4
      %v761 = vpop.permute.xlu0 %760
      %762 = vrot.lane.b32.xlu0 %v601, 4
      %v763 = vpop.permute.xlu0 %762
      %764 = vrot.lane.b32.xlu0 %v613, 4
      %v765 = vpop.permute.xlu0 %764
      %766 = vrot.lane.b32.xlu0 %v625, 4
      %v767 = vpop.permute.xlu0 %766
      %768 = vrot.lane.b32.xlu0 %v637, 4
      %v769 = vpop.permute.xlu0 %768
      %770 = vrot.lane.b32.xlu0 %v649, 4
      %v771 = vpop.permute.xlu0 %770
      %772 = vrot.lane.b32.xlu0 %v661, 4
      %v773 = vpop.permute.xlu0 %772
      %774 = vrot.lane.b32.xlu0 %v673, 4
      %v775 = vpop.permute.xlu0 %774
      %776 = vrot.lane.b32.xlu0 %v685, 4
      %v777 = vpop.permute.xlu0 %776
      %778 = vrot.lane.b32.xlu0 %v697, 4
      %v779 = vpop.permute.xlu0 %778
      %780 = vrot.lane.b32.xlu0 %v709, 4
      %v781 = vpop.permute.xlu0 %780
      %782 = vrot.lane.b32.xlu0 %v721, 4
      %v783 = vpop.permute.xlu0 %782
      %784 = vrot.lane.b32.xlu0 %v733, 4
      %v785 = vpop.permute.xlu0 %784
      %786 = vrot.lane.b32.xlu0 %v745, 4
      %v787 = vpop.permute.xlu0 %786
      %788 = vrot.lane.b32.xlu0 %v757, 4
      %v789 = vpop.permute.xlu0 %788
      %vm790 = vcmask 1046528
      %v791 = vrot.slane %v501, 1
      %v792 = vrot.slane %v549, 1
      %v793 = vsel %vm790, %v791, %v792
      %v794 = vrot.slane %v502, 1
      %v795 = vrot.slane %v550, 1
      %v796 = vsel %vm790, %v794, %v795
      %v797 = vrot.slane %v503, 1
      %v798 = vrot.slane %v551, 1
      %v799 = vsel %vm790, %v797, %v798
      %v800 = vrot.slane %v504, 1
      %v801 = vrot.slane %v552, 1
      %v802 = vsel %vm790, %v800, %v801
      %v803 = vrot.slane %v505, 1
      %v804 = vrot.slane %v553, 1
      %v805 = vsel %vm790, %v803, %v804
      %v806 = vrot.slane %v506, 1
      %v807 = vrot.slane %v554, 1
      %v808 = vsel %vm790, %v806, %v807
      %v809 = vrot.slane %v507, 1
      %v810 = vrot.slane %v555, 1
      %v811 = vsel %vm790, %v809, %v810
      %v812 = vrot.slane %v508, 1
      %v813 = vrot.slane %v556, 1
      %v814 = vsel %vm790, %v812, %v813
      %v815 = vrot.slane %v509, 1
      %v816 = vrot.slane %v557, 1
      %v817 = vsel %vm790, %v815, %v816
      %v818 = vrot.slane %v510, 1
      %v819 = vrot.slane %v558, 1
      %v820 = vsel %vm790, %v818, %v819
      %v821 = vrot.slane %v511, 1
      %v822 = vrot.slane %v559, 1
      %v823 = vsel %vm790, %v821, %v822
      %v824 = vrot.slane %v512, 1
      %v825 = vrot.slane %v560, 1
      %v826 = vsel %vm790, %v824, %v825
      %v827 = vrot.slane %v513, 1
      %v828 = vrot.slane %v561, 1
      %v829 = vsel %vm790, %v827, %v828
      %v830 = vrot.slane %v514, 1
      %v831 = vrot.slane %v562, 1
      %v832 = vsel %vm790, %v830, %v831
      %v833 = vrot.slane %v515, 1
      %v834 = vrot.slane %v563, 1
      %v835 = vsel %vm790, %v833, %v834
      %v836 = vrot.slane %v516, 1
      %v837 = vrot.slane %v564, 1
      %v838 = vsel %vm790, %v836, %v837
      %839 = vrot.lane.b32.xlu0 %v793, 8
      %v840 = vpop.permute.xlu0 %839
      %841 = vrot.lane.b32.xlu0 %v796, 8
      %v842 = vpop.permute.xlu0 %841
      %843 = vrot.lane.b32.xlu0 %v799, 8
      %v844 = vpop.permute.xlu0 %843
      %845 = vrot.lane.b32.xlu0 %v802, 8
      %v846 = vpop.permute.xlu0 %845
      %847 = vrot.lane.b32.xlu0 %v805, 8
      %v848 = vpop.permute.xlu0 %847
      %849 = vrot.lane.b32.xlu0 %v808, 8
      %v850 = vpop.permute.xlu0 %849
      %851 = vrot.lane.b32.xlu0 %v811, 8
      %v852 = vpop.permute.xlu0 %851
      %853 = vrot.lane.b32.xlu0 %v814, 8
      %v854 = vpop.permute.xlu0 %853
      %855 = vrot.lane.b32.xlu0 %v817, 8
      %v856 = vpop.permute.xlu0 %855
      %857 = vrot.lane.b32.xlu0 %v820, 8
      %v858 = vpop.permute.xlu0 %857
      %859 = vrot.lane.b32.xlu0 %v823, 8
      %v860 = vpop.permute.xlu0 %859
      %861 = vrot.lane.b32.xlu0 %v826, 8
      %v862 = vpop.permute.xlu0 %861
      %863 = vrot.lane.b32.xlu0 %v829, 8
      %v864 = vpop.permute.xlu0 %863
      %865 = vrot.lane.b32.xlu0 %v832, 8
      %v866 = vpop.permute.xlu0 %865
      %867 = vrot.lane.b32.xlu0 %v835, 8
      %v868 = vpop.permute.xlu0 %867
      %869 = vrot.lane.b32.xlu0 %v838, 8
      %v870 = vpop.permute.xlu0 %869
      %v903 = vunpack.c.l.b16 %v337
      %v904 = vunpack.c.l.b16 %v338
      %v905 = vunpack.c.l.b16 %v340
      %v906 = vunpack.c.l.b16 %v341
      %v907 = vunpack.c.l.b16 %v343
      %v908 = vunpack.c.l.b16 %v344
      %v909 = vunpack.c.l.b16 %v346
      %v910 = vunpack.c.l.b16 %v347
      %v911 = vunpack.c.l.b16 %v349
      %v912 = vunpack.c.l.b16 %v350
      %v913 = vunpack.c.l.b16 %v352
      %v914 = vunpack.c.l.b16 %v353
      %v915 = vunpack.c.l.b16 %v355
      %v916 = vunpack.c.l.b16 %v356
      %v917 = vunpack.c.l.b16 %v358
      %v918 = vunpack.c.l.b16 %v359
      %v919 = vunpack.c.l.b16 %v361
      %v920 = vunpack.c.l.b16 %v362
      %v921 = vunpack.c.l.b16 %v364
      %v922 = vunpack.c.l.b16 %v365
      %v923 = vunpack.c.l.b16 %v367
      %v924 = vunpack.c.l.b16 %v368
      %v925 = vunpack.c.l.b16 %v370
      %v926 = vunpack.c.l.b16 %v371
      %v927 = vunpack.c.l.b16 %v373
      %v928 = vunpack.c.l.b16 %v374
      %v929 = vunpack.c.l.b16 %v376
      %v930 = vunpack.c.l.b16 %v377
      %v931 = vunpack.c.l.b16 %v379
      %v932 = vunpack.c.l.b16 %v380
      %v933 = vunpack.c.l.b16 %v382
      %v934 = vunpack.c.l.b16 %v383
      %v935 = vpack.c.b16 %v904, %v903
      %v936 = vpack.c.b16 %v906, %v905
      %v937 = vpack.c.b16 %v908, %v907
      %v938 = vpack.c.b16 %v910, %v909
      %v939 = vpack.c.b16 %v912, %v911
      %v940 = vpack.c.b16 %v914, %v913
      %v941 = vpack.c.b16 %v916, %v915
      %v942 = vpack.c.b16 %v918, %v917
      %v943 = vpack.c.b16 %v920, %v919
      %v944 = vpack.c.b16 %v922, %v921
      %v945 = vpack.c.b16 %v924, %v923
      %v946 = vpack.c.b16 %v926, %v925
      %v947 = vpack.c.b16 %v928, %v927
      %v948 = vpack.c.b16 %v930, %v929
      %v949 = vpack.c.b16 %v932, %v931
      %v950 = vpack.c.b16 %v934, %v933
      %951 = vrot.lane.b32.xlu0 %v935, 12
      %v952 = vpop.permute.xlu0 %951
      %953 = vrot.lane.b32.xlu0 %v936, 12
      %v954 = vpop.permute.xlu0 %953
      %955 = vrot.lane.b32.xlu0 %v937, 12
      %v956 = vpop.permute.xlu0 %955
      %957 = vrot.lane.b32.xlu0 %v938, 12
      %v958 = vpop.permute.xlu0 %957
      %959 = vrot.lane.b32.xlu0 %v939, 12
      %v960 = vpop.permute.xlu0 %959
      %961 = vrot.lane.b32.xlu0 %v940, 12
      %v962 = vpop.permute.xlu0 %961
      %963 = vrot.lane.b32.xlu0 %v941, 12
      %v964 = vpop.permute.xlu0 %963
      %965 = vrot.lane.b32.xlu0 %v942, 12
      %v966 = vpop.permute.xlu0 %965
      %967 = vrot.lane.b32.xlu0 %v943, 12
      %v968 = vpop.permute.xlu0 %967
      %969 = vrot.lane.b32.xlu0 %v944, 12
      %v970 = vpop.permute.xlu0 %969
      %971 = vrot.lane.b32.xlu0 %v945, 12
      %v972 = vpop.permute.xlu0 %971
      %973 = vrot.lane.b32.xlu0 %v946, 12
      %v974 = vpop.permute.xlu0 %973
      %975 = vrot.lane.b32.xlu0 %v947, 12
      %v976 = vpop.permute.xlu0 %975
      %977 = vrot.lane.b32.xlu0 %v948, 12
      %v978 = vpop.permute.xlu0 %977
      %979 = vrot.lane.b32.xlu0 %v949, 12
      %v980 = vpop.permute.xlu0 %979
      %981 = vrot.lane.b32.xlu0 %v950, 12
      %v982 = vpop.permute.xlu0 %981
      %v999 = vunpack.c.l.b16 %v339
      %v1000 = vunpack.c.l.b16 %v342
      %v1001 = vunpack.c.l.b16 %v345
      %v1002 = vunpack.c.l.b16 %v348
      %v1003 = vunpack.c.l.b16 %v351
      %v1004 = vunpack.c.l.b16 %v354
      %v1005 = vunpack.c.l.b16 %v357
      %v1006 = vunpack.c.l.b16 %v360
      %v1007 = vunpack.c.l.b16 %v363
      %v1008 = vunpack.c.l.b16 %v366
      %v1009 = vunpack.c.l.b16 %v369
      %v1010 = vunpack.c.l.b16 %v372
      %v1011 = vunpack.c.l.b16 %v375
      %v1012 = vunpack.c.l.b16 %v378
      %v1013 = vunpack.c.l.b16 %v381
      %v1014 = vunpack.c.l.b16 %v384
      %v1015 = vpack.c.b16 %v999, %v999
      %v1016 = vpack.c.b16 %v1000, %v1000
      %v1017 = vpack.c.b16 %v1001, %v1001
      %v1018 = vpack.c.b16 %v1002, %v1002
      %v1019 = vpack.c.b16 %v1003, %v1003
      %v1020 = vpack.c.b16 %v1004, %v1004
      %v1021 = vpack.c.b16 %v1005, %v1005
      %v1022 = vpack.c.b16 %v1006, %v1006
      %v1023 = vpack.c.b16 %v1007, %v1007
      %v1024 = vpack.c.b16 %v1008, %v1008
      %v1025 = vpack.c.b16 %v1009, %v1009
      %v1026 = vpack.c.b16 %v1010, %v1010
      %v1027 = vpack.c.b16 %v1011, %v1011
      %v1028 = vpack.c.b16 %v1012, %v1012
      %v1029 = vpack.c.b16 %v1013, %v1013
      %v1030 = vpack.c.b16 %v1014, %v1014
      %v1032 = vshrl.u32 %v935, 16
      %v1034 = vshll.u32 %v935, 16
      %v1036 = vrot.slane %v1034, 1
      %v1037 = vor.u32 %v1032, %v1036
      %v1039 = vshll.u32 %v1015, 16
      %v1041 = vrot.slane %v1039, 1
      %v1042 = vsel %vm565, %v1037, %v1041
      %v1044 = vshrl.u32 %v936, 16
      %v1046 = vshll.u32 %v936, 16
      %v1048 = vrot.slane %v1046, 1
      %v1049 = vor.u32 %v1044, %v1048
      %v1051 = vshll.u32 %v1016, 16
      %v1053 = vrot.slane %v1051, 1
      %v1054 = vsel %vm565, %v1049, %v1053
      %v1056 = vshrl.u32 %v937, 16
      %v1058 = vshll.u32 %v937, 16
      %v1060 = vrot.slane %v1058, 1
      %v1061 = vor.u32 %v1056, %v1060
      %v1063 = vshll.u32 %v1017, 16
      %v1065 = vrot.slane %v1063, 1
      %v1066 = vsel %vm565, %v1061, %v1065
      %v1068 = vshrl.u32 %v938, 16
      %v1070 = vshll.u32 %v938, 16
      %v1072 = vrot.slane %v1070, 1
      %v1073 = vor.u32 %v1068, %v1072
      %v1075 = vshll.u32 %v1018, 16
      %v1077 = vrot.slane %v1075, 1
      %v1078 = vsel %vm565, %v1073, %v1077
      %v1080 = vshrl.u32 %v939, 16
      %v1082 = vshll.u32 %v939, 16
      %v1084 = vrot.slane %v1082, 1
      %v1085 = vor.u32 %v1080, %v1084
      %v1087 = vshll.u32 %v1019, 16
      %v1089 = vrot.slane %v1087, 1
      %v1090 = vsel %vm565, %v1085, %v1089
      %v1092 = vshrl.u32 %v940, 16
      %v1094 = vshll.u32 %v940, 16
      %v1096 = vrot.slane %v1094, 1
      %v1097 = vor.u32 %v1092, %v1096
      %v1099 = vshll.u32 %v1020, 16
      %v1101 = vrot.slane %v1099, 1
      %v1102 = vsel %vm565, %v1097, %v1101
      %v1104 = vshrl.u32 %v941, 16
      %v1106 = vshll.u32 %v941, 16
      %v1108 = vrot.slane %v1106, 1
      %v1109 = vor.u32 %v1104, %v1108
      %v1111 = vshll.u32 %v1021, 16
      %v1113 = vrot.slane %v1111, 1
      %v1114 = vsel %vm565, %v1109, %v1113
      %v1116 = vshrl.u32 %v942, 16
      %v1118 = vshll.u32 %v942, 16
      %v1120 = vrot.slane %v1118, 1
      %v1121 = vor.u32 %v1116, %v1120
      %v1123 = vshll.u32 %v1022, 16
      %v1125 = vrot.slane %v1123, 1
      %v1126 = vsel %vm565, %v1121, %v1125
      %v1128 = vshrl.u32 %v943, 16
      %v1130 = vshll.u32 %v943, 16
      %v1132 = vrot.slane %v1130, 1
      %v1133 = vor.u32 %v1128, %v1132
      %v1135 = vshll.u32 %v1023, 16
      %v1137 = vrot.slane %v1135, 1
      %v1138 = vsel %vm565, %v1133, %v1137
      %v1140 = vshrl.u32 %v944, 16
      %v1142 = vshll.u32 %v944, 16
      %v1144 = vrot.slane %v1142, 1
      %v1145 = vor.u32 %v1140, %v1144
      %v1147 = vshll.u32 %v1024, 16
      %v1149 = vrot.slane %v1147, 1
      %v1150 = vsel %vm565, %v1145, %v1149
      %v1152 = vshrl.u32 %v945, 16
      %v1154 = vshll.u32 %v945, 16
      %v1156 = vrot.slane %v1154, 1
      %v1157 = vor.u32 %v1152, %v1156
      %v1159 = vshll.u32 %v1025, 16
      %v1161 = vrot.slane %v1159, 1
      %v1162 = vsel %vm565, %v1157, %v1161
      %v1164 = vshrl.u32 %v946, 16
      %v1166 = vshll.u32 %v946, 16
      %v1168 = vrot.slane %v1166, 1
      %v1169 = vor.u32 %v1164, %v1168
      %v1171 = vshll.u32 %v1026, 16
      %v1173 = vrot.slane %v1171, 1
      %v1174 = vsel %vm565, %v1169, %v1173
      %v1176 = vshrl.u32 %v947, 16
      %v1178 = vshll.u32 %v947, 16
      %v1180 = vrot.slane %v1178, 1
      %v1181 = vor.u32 %v1176, %v1180
      %v1183 = vshll.u32 %v1027, 16
      %v1185 = vrot.slane %v1183, 1
      %v1186 = vsel %vm565, %v1181, %v1185
      %v1188 = vshrl.u32 %v948, 16
      %v1190 = vshll.u32 %v948, 16
      %v1192 = vrot.slane %v1190, 1
      %v1193 = vor.u32 %v1188, %v1192
      %v1195 = vshll.u32 %v1028, 16
      %v1197 = vrot.slane %v1195, 1
      %v1198 = vsel %vm565, %v1193, %v1197
      %v1200 = vshrl.u32 %v949, 16
      %v1202 = vshll.u32 %v949, 16
      %v1204 = vrot.slane %v1202, 1
      %v1205 = vor.u32 %v1200, %v1204
      %v1207 = vshll.u32 %v1029, 16
      %v1209 = vrot.slane %v1207, 1
      %v1210 = vsel %vm565, %v1205, %v1209
      %v1212 = vshrl.u32 %v950, 16
      %v1214 = vshll.u32 %v950, 16
      %v1216 = vrot.slane %v1214, 1
      %v1217 = vor.u32 %v1212, %v1216
      %v1219 = vshll.u32 %v1030, 16
      %v1221 = vrot.slane %v1219, 1
      %v1222 = vsel %vm565, %v1217, %v1221
      %1223 = vrot.lane.b32.xlu0 %v1042, 16
      %v1224 = vpop.permute.xlu0 %1223
      %1225 = vrot.lane.b32.xlu0 %v1054, 16
      %v1226 = vpop.permute.xlu0 %1225
      %1227 = vrot.lane.b32.xlu0 %v1066, 16
      %v1228 = vpop.permute.xlu0 %1227
      %1229 = vrot.lane.b32.xlu0 %v1078, 16
      %v1230 = vpop.permute.xlu0 %1229
      %1231 = vrot.lane.b32.xlu0 %v1090, 16
      %v1232 = vpop.permute.xlu0 %1231
      %1233 = vrot.lane.b32.xlu0 %v1102, 16
      %v1234 = vpop.permute.xlu0 %1233
      %1235 = vrot.lane.b32.xlu0 %v1114, 16
      %v1236 = vpop.permute.xlu0 %1235
      %1237 = vrot.lane.b32.xlu0 %v1126, 16
      %v1238 = vpop.permute.xlu0 %1237
      %1239 = vrot.lane.b32.xlu0 %v1138, 16
      %v1240 = vpop.permute.xlu0 %1239
      %1241 = vrot.lane.b32.xlu0 %v1150, 16
      %v1242 = vpop.permute.xlu0 %1241
      %1243 = vrot.lane.b32.xlu0 %v1162, 16
      %v1244 = vpop.permute.xlu0 %1243
      %1245 = vrot.lane.b32.xlu0 %v1174, 16
      %v1246 = vpop.permute.xlu0 %1245
      %1247 = vrot.lane.b32.xlu0 %v1186, 16
      %v1248 = vpop.permute.xlu0 %1247
      %1249 = vrot.lane.b32.xlu0 %v1198, 16
      %v1250 = vpop.permute.xlu0 %1249
      %1251 = vrot.lane.b32.xlu0 %v1210, 16
      %v1252 = vpop.permute.xlu0 %1251
      %1253 = vrot.lane.b32.xlu0 %v1222, 16
      %v1254 = vpop.permute.xlu0 %1253
      %v1255 = vrot.slane %v935, 1
      %v1256 = vrot.slane %v1015, 1
      %v1257 = vsel %vm790, %v1255, %v1256
      %v1258 = vrot.slane %v936, 1
      %v1259 = vrot.slane %v1016, 1
      %v1260 = vsel %vm790, %v1258, %v1259
      %v1261 = vrot.slane %v937, 1
      %v1262 = vrot.slane %v1017, 1
      %v1263 = vsel %vm790, %v1261, %v1262
      %v1264 = vrot.slane %v938, 1
      %v1265 = vrot.slane %v1018, 1
      %v1266 = vsel %vm790, %v1264, %v1265
      %v1267 = vrot.slane %v939, 1
      %v1268 = vrot.slane %v1019, 1
      %v1269 = vsel %vm790, %v1267, %v1268
      %v1270 = vrot.slane %v940, 1
      %v1271 = vrot.slane %v1020, 1
      %v1272 = vsel %vm790, %v1270, %v1271
      %v1273 = vrot.slane %v941, 1
      %v1274 = vrot.slane %v1021, 1
      %v1275 = vsel %vm790, %v1273, %v1274
      %v1276 = vrot.slane %v942, 1
      %v1277 = vrot.slane %v1022, 1
      %v1278 = vsel %vm790, %v1276, %v1277
      %v1279 = vrot.slane %v943, 1
      %v1280 = vrot.slane %v1023, 1
      %v1281 = vsel %vm790, %v1279, %v1280
      %v1282 = vrot.slane %v944, 1
      %v1283 = vrot.slane %v1024, 1
      %v1284 = vsel %vm790, %v1282, %v1283
      %v1285 = vrot.slane %v945, 1
      %v1286 = vrot.slane %v1025, 1
      %v1287 = vsel %vm790, %v1285, %v1286
      %v1288 = vrot.slane %v946, 1
      %v1289 = vrot.slane %v1026, 1
      %v1290 = vsel %vm790, %v1288, %v1289
      %v1291 = vrot.slane %v947, 1
      %v1292 = vrot.slane %v1027, 1
      %v1293 = vsel %vm790, %v1291, %v1292
      %v1294 = vrot.slane %v948, 1
      %v1295 = vrot.slane %v1028, 1
      %v1296 = vsel %vm790, %v1294, %v1295
      %v1297 = vrot.slane %v949, 1
      %v1298 = vrot.slane %v1029, 1
      %v1299 = vsel %vm790, %v1297, %v1298
      %v1300 = vrot.slane %v950, 1
      %v1301 = vrot.slane %v1030, 1
      %v1302 = vsel %vm790, %v1300, %v1301
      %1303 = vrot.lane.b32.xlu0 %v1257, 20
      %v1304 = vpop.permute.xlu0 %1303
      %1305 = vrot.lane.b32.xlu0 %v1260, 20
      %v1306 = vpop.permute.xlu0 %1305
      %1307 = vrot.lane.b32.xlu0 %v1263, 20
      %v1308 = vpop.permute.xlu0 %1307
      %1309 = vrot.lane.b32.xlu0 %v1266, 20
      %v1310 = vpop.permute.xlu0 %1309
      %1311 = vrot.lane.b32.xlu0 %v1269, 20
      %v1312 = vpop.permute.xlu0 %1311
      %1313 = vrot.lane.b32.xlu0 %v1272, 20
      %v1314 = vpop.permute.xlu0 %1313
      %1315 = vrot.lane.b32.xlu0 %v1275, 20
      %v1316 = vpop.permute.xlu0 %1315
      %1317 = vrot.lane.b32.xlu0 %v1278, 20
      %v1318 = vpop.permute.xlu0 %1317
      %1319 = vrot.lane.b32.xlu0 %v1281, 20
      %v1320 = vpop.permute.xlu0 %1319
      %1321 = vrot.lane.b32.xlu0 %v1284, 20
      %v1322 = vpop.permute.xlu0 %1321
      %1323 = vrot.lane.b32.xlu0 %v1287, 20
      %v1324 = vpop.permute.xlu0 %1323
      %1325 = vrot.lane.b32.xlu0 %v1290, 20
      %v1326 = vpop.permute.xlu0 %1325
      %1327 = vrot.lane.b32.xlu0 %v1293, 20
      %v1328 = vpop.permute.xlu0 %1327
      %1329 = vrot.lane.b32.xlu0 %v1296, 20
      %v1330 = vpop.permute.xlu0 %1329
      %1331 = vrot.lane.b32.xlu0 %v1299, 20
      %v1332 = vpop.permute.xlu0 %1331
      %1333 = vrot.lane.b32.xlu0 %v1302, 20
      %v1334 = vpop.permute.xlu0 %1333
      %v1367 = vunpack.c.l.b16 %v389
      %v1368 = vunpack.c.l.b16 %v390
      %v1369 = vunpack.c.l.b16 %v392
      %v1370 = vunpack.c.l.b16 %v393
      %v1371 = vunpack.c.l.b16 %v395
      %v1372 = vunpack.c.l.b16 %v396
      %v1373 = vunpack.c.l.b16 %v398
      %v1374 = vunpack.c.l.b16 %v399
      %v1375 = vunpack.c.l.b16 %v401
      %v1376 = vunpack.c.l.b16 %v402
      %v1377 = vunpack.c.l.b16 %v404
      %v1378 = vunpack.c.l.b16 %v405
      %v1379 = vunpack.c.l.b16 %v407
      %v1380 = vunpack.c.l.b16 %v408
      %v1381 = vunpack.c.l.b16 %v410
      %v1382 = vunpack.c.l.b16 %v411
      %v1383 = vunpack.c.l.b16 %v413
      %v1384 = vunpack.c.l.b16 %v414
      %v1385 = vunpack.c.l.b16 %v416
      %v1386 = vunpack.c.l.b16 %v417
      %v1387 = vunpack.c.l.b16 %v419
      %v1388 = vunpack.c.l.b16 %v420
      %v1389 = vunpack.c.l.b16 %v422
      %v1390 = vunpack.c.l.b16 %v423
      %v1391 = vunpack.c.l.b16 %v425
      %v1392 = vunpack.c.l.b16 %v426
      %v1393 = vunpack.c.l.b16 %v428
      %v1394 = vunpack.c.l.b16 %v429
      %v1395 = vunpack.c.l.b16 %v431
      %v1396 = vunpack.c.l.b16 %v432
      %v1397 = vunpack.c.l.b16 %v434
      %v1398 = vunpack.c.l.b16 %v435
      %v1399 = vpack.c.b16 %v1368, %v1367
      %v1400 = vpack.c.b16 %v1370, %v1369
      %v1401 = vpack.c.b16 %v1372, %v1371
      %v1402 = vpack.c.b16 %v1374, %v1373
      %v1403 = vpack.c.b16 %v1376, %v1375
      %v1404 = vpack.c.b16 %v1378, %v1377
      %v1405 = vpack.c.b16 %v1380, %v1379
      %v1406 = vpack.c.b16 %v1382, %v1381
      %v1407 = vpack.c.b16 %v1384, %v1383
      %v1408 = vpack.c.b16 %v1386, %v1385
      %v1409 = vpack.c.b16 %v1388, %v1387
      %v1410 = vpack.c.b16 %v1390, %v1389
      %v1411 = vpack.c.b16 %v1392, %v1391
      %v1412 = vpack.c.b16 %v1394, %v1393
      %v1413 = vpack.c.b16 %v1396, %v1395
      %v1414 = vpack.c.b16 %v1398, %v1397
      %1415 = vrot.lane.b32.xlu0 %v1399, 24
      %v1416 = vpop.permute.xlu0 %1415
      %1417 = vrot.lane.b32.xlu0 %v1400, 24
      %v1418 = vpop.permute.xlu0 %1417
      %1419 = vrot.lane.b32.xlu0 %v1401, 24
      %v1420 = vpop.permute.xlu0 %1419
      %1421 = vrot.lane.b32.xlu0 %v1402, 24
      %v1422 = vpop.permute.xlu0 %1421
      %1423 = vrot.lane.b32.xlu0 %v1403, 24
      %v1424 = vpop.permute.xlu0 %1423
      %1425 = vrot.lane.b32.xlu0 %v1404, 24
      %v1426 = vpop.permute.xlu0 %1425
      %1427 = vrot.lane.b32.xlu0 %v1405, 24
      %v1428 = vpop.permute.xlu0 %1427
      %1429 = vrot.lane.b32.xlu0 %v1406, 24
      %v1430 = vpop.permute.xlu0 %1429
      %1431 = vrot.lane.b32.xlu0 %v1407, 24
      %v1432 = vpop.permute.xlu0 %1431
      %1433 = vrot.lane.b32.xlu0 %v1408, 24
      %v1434 = vpop.permute.xlu0 %1433
      %1435 = vrot.lane.b32.xlu0 %v1409, 24
      %v1436 = vpop.permute.xlu0 %1435
      %1437 = vrot.lane.b32.xlu0 %v1410, 24
      %v1438 = vpop.permute.xlu0 %1437
      %1439 = vrot.lane.b32.xlu0 %v1411, 24
      %v1440 = vpop.permute.xlu0 %1439
      %1441 = vrot.lane.b32.xlu0 %v1412, 24
      %v1442 = vpop.permute.xlu0 %1441
      %1443 = vrot.lane.b32.xlu0 %v1413, 24
      %v1444 = vpop.permute.xlu0 %1443
      %1445 = vrot.lane.b32.xlu0 %v1414, 24
      %v1446 = vpop.permute.xlu0 %1445
      %v1463 = vunpack.c.l.b16 %v391
      %v1464 = vunpack.c.l.b16 %v394
      %v1465 = vunpack.c.l.b16 %v397
      %v1466 = vunpack.c.l.b16 %v400
      %v1467 = vunpack.c.l.b16 %v403
      %v1468 = vunpack.c.l.b16 %v406
      %v1469 = vunpack.c.l.b16 %v409
      %v1470 = vunpack.c.l.b16 %v412
      %v1471 = vunpack.c.l.b16 %v415
      %v1472 = vunpack.c.l.b16 %v418
      %v1473 = vunpack.c.l.b16 %v421
      %v1474 = vunpack.c.l.b16 %v424
      %v1475 = vunpack.c.l.b16 %v427
      %v1476 = vunpack.c.l.b16 %v430
      %v1477 = vunpack.c.l.b16 %v433
      %v1478 = vunpack.c.l.b16 %v436
      %v1479 = vpack.c.b16 %v1463, %v1463
      %v1480 = vpack.c.b16 %v1464, %v1464
      %v1481 = vpack.c.b16 %v1465, %v1465
      %v1482 = vpack.c.b16 %v1466, %v1466
      %v1483 = vpack.c.b16 %v1467, %v1467
      %v1484 = vpack.c.b16 %v1468, %v1468
      %v1485 = vpack.c.b16 %v1469, %v1469
      %v1486 = vpack.c.b16 %v1470, %v1470
      %v1487 = vpack.c.b16 %v1471, %v1471
      %v1488 = vpack.c.b16 %v1472, %v1472
      %v1489 = vpack.c.b16 %v1473, %v1473
      %v1490 = vpack.c.b16 %v1474, %v1474
      %v1491 = vpack.c.b16 %v1475, %v1475
      %v1492 = vpack.c.b16 %v1476, %v1476
      %v1493 = vpack.c.b16 %v1477, %v1477
      %v1494 = vpack.c.b16 %v1478, %v1478
      %v1496 = vshrl.u32 %v1399, 16
      %v1498 = vshll.u32 %v1399, 16
      %v1500 = vrot.slane %v1498, 1
      %v1501 = vor.u32 %v1496, %v1500
      %v1503 = vshll.u32 %v1479, 16
      %v1505 = vrot.slane %v1503, 1
      %v1506 = vsel %vm565, %v1501, %v1505
      %v1508 = vshrl.u32 %v1400, 16
      %v1510 = vshll.u32 %v1400, 16
      %v1512 = vrot.slane %v1510, 1
      %v1513 = vor.u32 %v1508, %v1512
      %v1515 = vshll.u32 %v1480, 16
      %v1517 = vrot.slane %v1515, 1
      %v1518 = vsel %vm565, %v1513, %v1517
      %v1520 = vshrl.u32 %v1401, 16
      %v1522 = vshll.u32 %v1401, 16
      %v1524 = vrot.slane %v1522, 1
      %v1525 = vor.u32 %v1520, %v1524
      %v1527 = vshll.u32 %v1481, 16
      %v1529 = vrot.slane %v1527, 1
      %v1530 = vsel %vm565, %v1525, %v1529
      %v1532 = vshrl.u32 %v1402, 16
      %v1534 = vshll.u32 %v1402, 16
      %v1536 = vrot.slane %v1534, 1
      %v1537 = vor.u32 %v1532, %v1536
      %v1539 = vshll.u32 %v1482, 16
      %v1541 = vrot.slane %v1539, 1
      %v1542 = vsel %vm565, %v1537, %v1541
      %v1544 = vshrl.u32 %v1403, 16
      %v1546 = vshll.u32 %v1403, 16
      %v1548 = vrot.slane %v1546, 1
      %v1549 = vor.u32 %v1544, %v1548
      %v1551 = vshll.u32 %v1483, 16
      %v1553 = vrot.slane %v1551, 1
      %v1554 = vsel %vm565, %v1549, %v1553
      %v1556 = vshrl.u32 %v1404, 16
      %v1558 = vshll.u32 %v1404, 16
      %v1560 = vrot.slane %v1558, 1
      %v1561 = vor.u32 %v1556, %v1560
      %v1563 = vshll.u32 %v1484, 16
      %v1565 = vrot.slane %v1563, 1
      %v1566 = vsel %vm565, %v1561, %v1565
      %v1568 = vshrl.u32 %v1405, 16
      %v1570 = vshll.u32 %v1405, 16
      %v1572 = vrot.slane %v1570, 1
      %v1573 = vor.u32 %v1568, %v1572
      %v1575 = vshll.u32 %v1485, 16
      %v1577 = vrot.slane %v1575, 1
      %v1578 = vsel %vm565, %v1573, %v1577
      %v1580 = vshrl.u32 %v1406, 16
      %v1582 = vshll.u32 %v1406, 16
      %v1584 = vrot.slane %v1582, 1
      %v1585 = vor.u32 %v1580, %v1584
      %v1587 = vshll.u32 %v1486, 16
      %v1589 = vrot.slane %v1587, 1
      %v1590 = vsel %vm565, %v1585, %v1589
      %v1592 = vshrl.u32 %v1407, 16
      %v1594 = vshll.u32 %v1407, 16
      %v1596 = vrot.slane %v1594, 1
      %v1597 = vor.u32 %v1592, %v1596
      %v1599 = vshll.u32 %v1487, 16
      %v1601 = vrot.slane %v1599, 1
      %v1602 = vsel %vm565, %v1597, %v1601
      %v1604 = vshrl.u32 %v1408, 16
      %v1606 = vshll.u32 %v1408, 16
      %v1608 = vrot.slane %v1606, 1
      %v1609 = vor.u32 %v1604, %v1608
      %v1611 = vshll.u32 %v1488, 16
      %v1613 = vrot.slane %v1611, 1
      %v1614 = vsel %vm565, %v1609, %v1613
      %v1616 = vshrl.u32 %v1409, 16
      %v1618 = vshll.u32 %v1409, 16
      %v1620 = vrot.slane %v1618, 1
      %v1621 = vor.u32 %v1616, %v1620
      %v1623 = vshll.u32 %v1489, 16
      %v1625 = vrot.slane %v1623, 1
      %v1626 = vsel %vm565, %v1621, %v1625
      %v1628 = vshrl.u32 %v1410, 16
      %v1630 = vshll.u32 %v1410, 16
      %v1632 = vrot.slane %v1630, 1
      %v1633 = vor.u32 %v1628, %v1632
      %v1635 = vshll.u32 %v1490, 16
      %v1637 = vrot.slane %v1635, 1
      %v1638 = vsel %vm565, %v1633, %v1637
      %v1640 = vshrl.u32 %v1411, 16
      %v1642 = vshll.u32 %v1411, 16
      %v1644 = vrot.slane %v1642, 1
      %v1645 = vor.u32 %v1640, %v1644
      %v1647 = vshll.u32 %v1491, 16
      %v1649 = vrot.slane %v1647, 1
      %v1650 = vsel %vm565, %v1645, %v1649
      %v1652 = vshrl.u32 %v1412, 16
      %v1654 = vshll.u32 %v1412, 16
      %v1656 = vrot.slane %v1654, 1
      %v1657 = vor.u32 %v1652, %v1656
      %v1659 = vshll.u32 %v1492, 16
      %v1661 = vrot.slane %v1659, 1
      %v1662 = vsel %vm565, %v1657, %v1661
      %v1664 = vshrl.u32 %v1413, 16
      %v1666 = vshll.u32 %v1413, 16
      %v1668 = vrot.slane %v1666, 1
      %v1669 = vor.u32 %v1664, %v1668
      %v1671 = vshll.u32 %v1493, 16
      %v1673 = vrot.slane %v1671, 1
      %v1674 = vsel %vm565, %v1669, %v1673
      %v1676 = vshrl.u32 %v1414, 16
      %v1678 = vshll.u32 %v1414, 16
      %v1680 = vrot.slane %v1678, 1
      %v1681 = vor.u32 %v1676, %v1680
      %v1683 = vshll.u32 %v1494, 16
      %v1685 = vrot.slane %v1683, 1
      %v1686 = vsel %vm565, %v1681, %v1685
      %1687 = vrot.lane.b32.xlu0 %v1506, 28
      %v1688 = vpop.permute.xlu0 %1687
      %1689 = vrot.lane.b32.xlu0 %v1518, 28
      %v1690 = vpop.permute.xlu0 %1689
      %1691 = vrot.lane.b32.xlu0 %v1530, 28
      %v1692 = vpop.permute.xlu0 %1691
      %1693 = vrot.lane.b32.xlu0 %v1542, 28
      %v1694 = vpop.permute.xlu0 %1693
      %1695 = vrot.lane.b32.xlu0 %v1554, 28
      %v1696 = vpop.permute.xlu0 %1695
      %1697 = vrot.lane.b32.xlu0 %v1566, 28
      %v1698 = vpop.permute.xlu0 %1697
      %1699 = vrot.lane.b32.xlu0 %v1578, 28
      %v1700 = vpop.permute.xlu0 %1699
      %1701 = vrot.lane.b32.xlu0 %v1590, 28
      %v1702 = vpop.permute.xlu0 %1701
      %1703 = vrot.lane.b32.xlu0 %v1602, 28
      %v1704 = vpop.permute.xlu0 %1703
      %1705 = vrot.lane.b32.xlu0 %v1614, 28
      %v1706 = vpop.permute.xlu0 %1705
      %1707 = vrot.lane.b32.xlu0 %v1626, 28
      %v1708 = vpop.permute.xlu0 %1707
      %1709 = vrot.lane.b32.xlu0 %v1638, 28
      %v1710 = vpop.permute.xlu0 %1709
      %1711 = vrot.lane.b32.xlu0 %v1650, 28
      %v1712 = vpop.permute.xlu0 %1711
      %1713 = vrot.lane.b32.xlu0 %v1662, 28
      %v1714 = vpop.permute.xlu0 %1713
      %1715 = vrot.lane.b32.xlu0 %v1674, 28
      %v1716 = vpop.permute.xlu0 %1715
      %1717 = vrot.lane.b32.xlu0 %v1686, 28
      %v1718 = vpop.permute.xlu0 %1717
      %v1719 = vrot.slane %v1399, 1
      %v1720 = vrot.slane %v1479, 1
      %v1721 = vsel %vm790, %v1719, %v1720
      %v1722 = vrot.slane %v1400, 1
      %v1723 = vrot.slane %v1480, 1
      %v1724 = vsel %vm790, %v1722, %v1723
      %v1725 = vrot.slane %v1401, 1
      %v1726 = vrot.slane %v1481, 1
      %v1727 = vsel %vm790, %v1725, %v1726
      %v1728 = vrot.slane %v1402, 1
      %v1729 = vrot.slane %v1482, 1
      %v1730 = vsel %vm790, %v1728, %v1729
      %v1731 = vrot.slane %v1403, 1
      %v1732 = vrot.slane %v1483, 1
      %v1733 = vsel %vm790, %v1731, %v1732
      %v1734 = vrot.slane %v1404, 1
      %v1735 = vrot.slane %v1484, 1
      %v1736 = vsel %vm790, %v1734, %v1735
      %v1737 = vrot.slane %v1405, 1
      %v1738 = vrot.slane %v1485, 1
      %v1739 = vsel %vm790, %v1737, %v1738
      %v1740 = vrot.slane %v1406, 1
      %v1741 = vrot.slane %v1486, 1
      %v1742 = vsel %vm790, %v1740, %v1741
      %v1743 = vrot.slane %v1407, 1
      %v1744 = vrot.slane %v1487, 1
      %v1745 = vsel %vm790, %v1743, %v1744
      %v1746 = vrot.slane %v1408, 1
      %v1747 = vrot.slane %v1488, 1
      %v1748 = vsel %vm790, %v1746, %v1747
      %v1749 = vrot.slane %v1409, 1
      %v1750 = vrot.slane %v1489, 1
      %v1751 = vsel %vm790, %v1749, %v1750
      %v1752 = vrot.slane %v1410, 1
      %v1753 = vrot.slane %v1490, 1
      %v1754 = vsel %vm790, %v1752, %v1753
      %v1755 = vrot.slane %v1411, 1
      %v1756 = vrot.slane %v1491, 1
      %v1757 = vsel %vm790, %v1755, %v1756
      %v1758 = vrot.slane %v1412, 1
      %v1759 = vrot.slane %v1492, 1
      %v1760 = vsel %vm790, %v1758, %v1759
      %v1761 = vrot.slane %v1413, 1
      %v1762 = vrot.slane %v1493, 1
      %v1763 = vsel %vm790, %v1761, %v1762
      %v1764 = vrot.slane %v1414, 1
      %v1765 = vrot.slane %v1494, 1
      %v1766 = vsel %vm790, %v1764, %v1765
      %1767 = vrot.lane.b32.xlu0 %v1721, 32
      %v1768 = vpop.permute.xlu0 %1767
      %1769 = vrot.lane.b32.xlu0 %v1724, 32
      %v1770 = vpop.permute.xlu0 %1769
      %1771 = vrot.lane.b32.xlu0 %v1727, 32
      %v1772 = vpop.permute.xlu0 %1771
      %1773 = vrot.lane.b32.xlu0 %v1730, 32
      %v1774 = vpop.permute.xlu0 %1773
      %1775 = vrot.lane.b32.xlu0 %v1733, 32
      %v1776 = vpop.permute.xlu0 %1775
      %1777 = vrot.lane.b32.xlu0 %v1736, 32
      %v1778 = vpop.permute.xlu0 %1777
      %1779 = vrot.lane.b32.xlu0 %v1739, 32
      %v1780 = vpop.permute.xlu0 %1779
      %1781 = vrot.lane.b32.xlu0 %v1742, 32
      %v1782 = vpop.permute.xlu0 %1781
      %1783 = vrot.lane.b32.xlu0 %v1745, 32
      %v1784 = vpop.permute.xlu0 %1783
      %1785 = vrot.lane.b32.xlu0 %v1748, 32
      %v1786 = vpop.permute.xlu0 %1785
      %1787 = vrot.lane.b32.xlu0 %v1751, 32
      %v1788 = vpop.permute.xlu0 %1787
      %1789 = vrot.lane.b32.xlu0 %v1754, 32
      %v1790 = vpop.permute.xlu0 %1789
      %1791 = vrot.lane.b32.xlu0 %v1757, 32
      %v1792 = vpop.permute.xlu0 %1791
      %1793 = vrot.lane.b32.xlu0 %v1760, 32
      %v1794 = vpop.permute.xlu0 %1793
      %1795 = vrot.lane.b32.xlu0 %v1763, 32
      %v1796 = vpop.permute.xlu0 %1795
      %1797 = vrot.lane.b32.xlu0 %v1766, 32
      %v1798 = vpop.permute.xlu0 %1797
      %vm1799 = vcmask 31744
      %v1801 = vsel %vm1799, %v501, %v759
      %v1803 = vsel %vm1799, %v502, %v761
      %v1805 = vsel %vm1799, %v503, %v763
      %v1807 = vsel %vm1799, %v504, %v765
      %v1809 = vsel %vm1799, %v505, %v767
      %v1811 = vsel %vm1799, %v506, %v769
      %v1813 = vsel %vm1799, %v507, %v771
      %v1815 = vsel %vm1799, %v508, %v773
      %v1817 = vsel %vm1799, %v509, %v775
      %v1819 = vsel %vm1799, %v510, %v777
      %v1821 = vsel %vm1799, %v511, %v779
      %v1823 = vsel %vm1799, %v512, %v781
      %v1825 = vsel %vm1799, %v513, %v783
      %v1827 = vsel %vm1799, %v514, %v785
      %v1829 = vsel %vm1799, %v515, %v787
      %v1831 = vsel %vm1799, %v516, %v789
      %vm1832 = vcmask 64512
      %v1834 = vsel %vm1832, %v1801, %v840
      %v1836 = vsel %vm1832, %v1803, %v842
      %v1838 = vsel %vm1832, %v1805, %v844
      %v1840 = vsel %vm1832, %v1807, %v846
      %v1842 = vsel %vm1832, %v1809, %v848
      %v1844 = vsel %vm1832, %v1811, %v850
      %v1846 = vsel %vm1832, %v1813, %v852
      %v1848 = vsel %vm1832, %v1815, %v854
      %v1850 = vsel %vm1832, %v1817, %v856
      %v1852 = vsel %vm1832, %v1819, %v858
      %v1854 = vsel %vm1832, %v1821, %v860
      %v1856 = vsel %vm1832, %v1823, %v862
      %v1858 = vsel %vm1832, %v1825, %v864
      %v1860 = vsel %vm1832, %v1827, %v866
      %v1862 = vsel %vm1832, %v1829, %v868
      %v1864 = vsel %vm1832, %v1831, %v870
      %vm1865 = vcmask 97280
      %v1867 = vsel %vm1865, %v1834, %v952
      %v1869 = vsel %vm1865, %v1836, %v954
      %v1871 = vsel %vm1865, %v1838, %v956
      %v1873 = vsel %vm1865, %v1840, %v958
      %v1875 = vsel %vm1865, %v1842, %v960
      %v1877 = vsel %vm1865, %v1844, %v962
      %v1879 = vsel %vm1865, %v1846, %v964
      %v1881 = vsel %vm1865, %v1848, %v966
      %v1883 = vsel %vm1865, %v1850, %v968
      %v1885 = vsel %vm1865, %v1852, %v970
      %v1887 = vsel %vm1865, %v1854, %v972
      %v1889 = vsel %vm1865, %v1856, %v974
      %v1891 = vsel %vm1865, %v1858, %v976
      %v1893 = vsel %vm1865, %v1860, %v978
      %v1895 = vsel %vm1865, %v1862, %v980
      %v1897 = vsel %vm1865, %v1864, %v982
      %vm1898 = vcmask 130048
      %v1900 = vsel %vm1898, %v1867, %v1224
      %v1902 = vsel %vm1898, %v1869, %v1226
      %v1904 = vsel %vm1898, %v1871, %v1228
      %v1906 = vsel %vm1898, %v1873, %v1230
      %v1908 = vsel %vm1898, %v1875, %v1232
      %v1910 = vsel %vm1898, %v1877, %v1234
      %v1912 = vsel %vm1898, %v1879, %v1236
      %v1914 = vsel %vm1898, %v1881, %v1238
      %v1916 = vsel %vm1898, %v1883, %v1240
      %v1918 = vsel %vm1898, %v1885, %v1242
      %v1920 = vsel %vm1898, %v1887, %v1244
      %v1922 = vsel %vm1898, %v1889, %v1246
      %v1924 = vsel %vm1898, %v1891, %v1248
      %v1926 = vsel %vm1898, %v1893, %v1250
      %v1928 = vsel %vm1898, %v1895, %v1252
      %v1930 = vsel %vm1898, %v1897, %v1254
      %vm1931 = vcmask 162816
      %v1933 = vsel %vm1931, %v1900, %v1304
      %v1935 = vsel %vm1931, %v1902, %v1306
      %v1937 = vsel %vm1931, %v1904, %v1308
      %v1939 = vsel %vm1931, %v1906, %v1310
      %v1941 = vsel %vm1931, %v1908, %v1312
      %v1943 = vsel %vm1931, %v1910, %v1314
      %v1945 = vsel %vm1931, %v1912, %v1316
      %v1947 = vsel %vm1931, %v1914, %v1318
      %v1949 = vsel %vm1931, %v1916, %v1320
      %v1951 = vsel %vm1931, %v1918, %v1322
      %v1953 = vsel %vm1931, %v1920, %v1324
      %v1955 = vsel %vm1931, %v1922, %v1326
      %v1957 = vsel %vm1931, %v1924, %v1328
      %v1959 = vsel %vm1931, %v1926, %v1330
      %v1961 = vsel %vm1931, %v1928, %v1332
      %v1963 = vsel %vm1931, %v1930, %v1334
      %vm1964 = vcmask 195584
      %v1966 = vsel %vm1964, %v1933, %v1416
      %v1968 = vsel %vm1964, %v1935, %v1418
      %v1970 = vsel %vm1964, %v1937, %v1420
      %v1972 = vsel %vm1964, %v1939, %v1422
      %v1974 = vsel %vm1964, %v1941, %v1424
      %v1976 = vsel %vm1964, %v1943, %v1426
      %v1978 = vsel %vm1964, %v1945, %v1428
      %v1980 = vsel %vm1964, %v1947, %v1430
      %v1982 = vsel %vm1964, %v1949, %v1432
      %v1984 = vsel %vm1964, %v1951, %v1434
      %v1986 = vsel %vm1964, %v1953, %v1436
      %v1988 = vsel %vm1964, %v1955, %v1438
      %v1990 = vsel %vm1964, %v1957, %v1440
      %v1992 = vsel %vm1964, %v1959, %v1442
      %v1994 = vsel %vm1964, %v1961, %v1444
      %v1996 = vsel %vm1964, %v1963, %v1446
      %vm1997 = vcmask 228352
      %v1999 = vsel %vm1997, %v1966, %v1688
      %v2001 = vsel %vm1997, %v1968, %v1690
      %v2003 = vsel %vm1997, %v1970, %v1692
      %v2005 = vsel %vm1997, %v1972, %v1694
      %v2007 = vsel %vm1997, %v1974, %v1696
      %v2009 = vsel %vm1997, %v1976, %v1698
      %v2011 = vsel %vm1997, %v1978, %v1700
      %v2013 = vsel %vm1997, %v1980, %v1702
      %v2015 = vsel %vm1997, %v1982, %v1704
      %v2017 = vsel %vm1997, %v1984, %v1706
      %v2019 = vsel %vm1997, %v1986, %v1708
      %v2021 = vsel %vm1997, %v1988, %v1710
      %v2023 = vsel %vm1997, %v1990, %v1712
      %v2025 = vsel %vm1997, %v1992, %v1714
      %v2027 = vsel %vm1997, %v1994, %v1716
      %v2029 = vsel %vm1997, %v1996, %v1718
      %vm2030 = vcmask 261120
      %v2032 = vsel %vm2030, %v1999, %v1768
      %v2034 = vsel %vm2030, %v2001, %v1770
      %v2036 = vsel %vm2030, %v2003, %v1772
      %v2038 = vsel %vm2030, %v2005, %v1774
      %v2040 = vsel %vm2030, %v2007, %v1776
      %v2042 = vsel %vm2030, %v2009, %v1778
      %v2044 = vsel %vm2030, %v2011, %v1780
      %v2046 = vsel %vm2030, %v2013, %v1782
      %v2048 = vsel %vm2030, %v2015, %v1784
      %v2050 = vsel %vm2030, %v2017, %v1786
      %v2052 = vsel %vm2030, %v2019, %v1788
      %v2054 = vsel %vm2030, %v2021, %v1790
      %v2056 = vsel %vm2030, %v2023, %v1792
      %v2058 = vsel %vm2030, %v2025, %v1794
      %v2060 = vsel %vm2030, %v2027, %v1796
      %v2062 = vsel %vm2030, %v2029, %v1798
      %v2063 = vld [vmem:[%s261] sm:$0xf]
      %v2064 = vld [vmem:[%s261 + $0x4] sm:$0xf]
      %v2065 = vld [vmem:[%s261 + $0x8] sm:$0xf]
      %v2066 = vld [vmem:[%s261 + $0xc] sm:$0xf]
      %v2067 = vld [vmem:[%s261 + $0x10] sm:$0x3]
      %v2073 = vunpack.c.l.b16 %v2063
      %v2074 = vunpack.c.l.b16 %v2064
      %v2075 = vunpack.c.l.b16 %v2065
      %v2076 = vunpack.c.l.b16 %v2066
      %v2077 = vunpack.c.l.b16 %v2067
      %v2078 = vpack.c.b16 %v2074, %v2073
      %v2079 = vpack.c.b16 %v2076, %v2075
      %v2080 = vpack.c.b16 %v2077, %v2077
      %vm2083 = vcmask 293888
      %v2084 = vsel %vm2083, %v2032, 0
      %v2086 = vsel %vm2083, %v2034, 0
      %v2088 = vsel %vm2083, %v2036, 0
      %v2090 = vsel %vm2083, %v2038, 0
      %v2092 = vsel %vm2083, %v2040, 0
      %v2094 = vsel %vm2083, %v2042, 0
      %v2096 = vsel %vm2083, %v2044, 0
      %v2098 = vsel %vm2083, %v2046, 0
      %v2100 = vsel %vm2083, %v2048, 0
      %v2102 = vsel %vm2083, %v2050, 0
      %v2104 = vsel %vm2083, %v2052, 0
      %v2106 = vsel %vm2083, %v2054, 0
      %v2108 = vsel %vm2083, %v2056, 0
      %v2110 = vsel %vm2083, %v2058, 0
      %v2112 = vsel %vm2083, %v2060, 0
      %v2114 = vsel %vm2083, %v2062, 0
      %vm2116 = vcmask 1041408
      %v2118 = vsel %vm2116, %v2080, 0
      %2120 = vmatprep.subr.bf16.mxu0 0
      %2121 = vmatpush1.bf16.msra.mxu0 %v2078
      %2122 = vmatprep.subr.bf16.mxu0 0
      %2123 = vmatpush1.bf16.msra.mxu0 %v2079
      %2124 = vmatprep.subr.bf16.mxu0 0
      %2125 = vmatpush1.bf16.msra.mxu0 %v2118
      %2126 = vmatprep.subr.bf16.mxu0 0
      %2127 = vmatpush1.bf16.msra.mxu0 0
      %2128 = vmatprep.subr.bf16.mxu0 0
      %2129 = vmatpush1.bf16.msra.mxu0 0
      %2130 = vmatprep.subr.bf16.mxu0 0
      %2131 = vmatpush1.bf16.msra.mxu0 0
      %2132 = vmatprep.subr.bf16.mxu0 0
      %2133 = vmatpush1.bf16.msra.mxu0 0
      %2134 = vmatprep.subr.bf16.mxu0 0
      %2135 = vmatpush1.bf16.msra.mxu0 0
      %2136 = vmatprep.subr.bf16.mxu0 0
      %2137 = vmatpush1.bf16.msra.mxu0 0
      %2138 = vmatprep.subr.bf16.mxu0 0
      %2139 = vmatpush1.bf16.msra.mxu0 0
      %2140 = vmatprep.subr.bf16.mxu0 0
      %2141 = vmatpush1.bf16.msra.mxu0 0
      %2142 = vmatprep.subr.bf16.mxu0 0
      %2143 = vmatpush1.bf16.msra.mxu0 0
      %2144 = vmatprep.subr.bf16.mxu0 0
      %2145 = vmatpush1.bf16.msra.mxu0 0
      %2146 = vmatprep.subr.bf16.mxu0 0
      %2147 = vmatpush1.bf16.msra.mxu0 0
      %2148 = vmatprep.subr.bf16.mxu0 0
      %2149 = vmatpush1.bf16.msra.mxu0 0
      %2150 = vmatprep.subr.bf16.mxu0 0
      %2151 = vmatpush1.bf16.msra.mxu0 0
      %2152 = vmatprep.mubr.bf16.mxu0 0
      %2153 = vmatmul.mubr.bf16.gmra.mrb[0].mxu0 %v2084
      %v2154 = vpop.f32.mrb[0].mxu0
      %v2155 = vadd.f32 0.0, %v2154
      %v2156 = vpop.f32.mrb[0].mxu0
      %v2157 = vpop.f32.mrb[0].mxu0
      %v2158 = vadd.f32 0.0, %v2157
      %v2159 = vpop.f32.mrb[0].mxu0
      %2160 = vmatprep.mubr.bf16.mxu0 0
      %2161 = vmatmul.mubr.bf16.gmra.mrb[0].mxu0 %v2086
      %v2162 = vpop.f32.mrb[0].mxu0
      %v2163 = vadd.f32 0.0, %v2162
      %v2164 = vpop.f32.mrb[0].mxu0
      %v2165 = vpop.f32.mrb[0].mxu0
      %v2166 = vadd.f32 0.0, %v2165
      %v2167 = vpop.f32.mrb[0].mxu0
      %2168 = vmatprep.mubr.bf16.mxu0 0
      %2169 = vmatmul.mubr.bf16.gmra.mrb[0].mxu0 %v2088
      %v2170 = vpop.f32.mrb[0].mxu0
      %v2171 = vadd.f32 0.0, %v2170
      %v2172 = vpop.f32.mrb[0].mxu0
      %v2173 = vpop.f32.mrb[0].mxu0
      %v2174 = vadd.f32 0.0, %v2173
      %v2175 = vpop.f32.mrb[0].mxu0
      %2176 = vmatprep.mubr.bf16.mxu0 0
      %2177 = vmatmul.mubr.bf16.gmra.mrb[0].mxu0 %v2090
      %v2178 = vpop.f32.mrb[0].mxu0
      %v2179 = vadd.f32 0.0, %v2178
      %v2180 = vpop.f32.mrb[0].mxu0
      %v2181 = vpop.f32.mrb[0].mxu0
      %v2182 = vadd.f32 0.0, %v2181
      %v2183 = vpop.f32.mrb[0].mxu0
      %2184 = vmatprep.mubr.bf16.mxu0 0
      %2185 = vmatmul.mubr.bf16.gmra.mrb[0].mxu0 %v2092
      %v2186 = vpop.f32.mrb[0].mxu0
      %v2187 = vadd.f32 0.0, %v2186
      %v2188 = vpop.f32.mrb[0].mxu0
      %v2189 = vpop.f32.mrb[0].mxu0
      %v2190 = vadd.f32 0.0, %v2189
      %v2191 = vpop.f32.mrb[0].mxu0
      %2192 = vmatprep.mubr.bf16.mxu0 0
      %2193 = vmatmul.mubr.bf16.gmra.mrb[0].mxu0 %v2094
      %v2194 = vpop.f32.mrb[0].mxu0
      %v2195 = vadd.f32 0.0, %v2194
      %v2196 = vpop.f32.mrb[0].mxu0
      %v2197 = vpop.f32.mrb[0].mxu0
      %v2198 = vadd.f32 0.0, %v2197
      %v2199 = vpop.f32.mrb[0].mxu0
      %2200 = vmatprep.mubr.bf16.mxu0 0
      %2201 = vmatmul.mubr.bf16.gmra.mrb[0].mxu0 %v2096
      %v2202 = vpop.f32.mrb[0].mxu0
      %v2203 = vadd.f32 0.0, %v2202
      %v2204 = vpop.f32.mrb[0].mxu0
      %v2205 = vpop.f32.mrb[0].mxu0
      %v2206 = vadd.f32 0.0, %v2205
      %v2207 = vpop.f32.mrb[0].mxu0
      %2208 = vmatprep.mubr.bf16.mxu0 0
      %2209 = vmatmul.mubr.bf16.gmra.mrb[0].mxu0 %v2098
      %v2210 = vpop.f32.mrb[0].mxu0
      %v2211 = vadd.f32 0.0, %v2210
      %v2212 = vpop.f32.mrb[0].mxu0
      %v2213 = vpop.f32.mrb[0].mxu0
      %v2214 = vadd.f32 0.0, %v2213
      %v2215 = vpop.f32.mrb[0].mxu0
      %2216 = vmatprep.mubr.bf16.mxu0 0
      %2217 = vmatmul.mubr.bf16.gmra.mrb[0].mxu0 %v2100
      %v2218 = vpop.f32.mrb[0].mxu0
      %v2219 = vadd.f32 0.0, %v2218
      %v2220 = vpop.f32.mrb[0].mxu0
      %v2221 = vpop.f32.mrb[0].mxu0
      %v2222 = vadd.f32 0.0, %v2221
      %v2223 = vpop.f32.mrb[0].mxu0
      %2224 = vmatprep.mubr.bf16.mxu0 0
      %2225 = vmatmul.mubr.bf16.gmra.mrb[0].mxu0 %v2102
      %v2226 = vpop.f32.mrb[0].mxu0
      %v2227 = vadd.f32 0.0, %v2226
      %v2228 = vpop.f32.mrb[0].mxu0
      %v2229 = vpop.f32.mrb[0].mxu0
      %v2230 = vadd.f32 0.0, %v2229
      %v2231 = vpop.f32.mrb[0].mxu0
      %2232 = vmatprep.mubr.bf16.mxu0 0
      %2233 = vmatmul.mubr.bf16.gmra.mrb[0].mxu0 %v2104
      %v2234 = vpop.f32.mrb[0].mxu0
      %v2235 = vadd.f32 0.0, %v2234
      %v2236 = vpop.f32.mrb[0].mxu0
      %v2237 = vpop.f32.mrb[0].mxu0
      %v2238 = vadd.f32 0.0, %v2237
      %v2239 = vpop.f32.mrb[0].mxu0
      %2240 = vmatprep.mubr.bf16.mxu0 0
      %2241 = vmatmul.mubr.bf16.gmra.mrb[0].mxu0 %v2106
      %v2242 = vpop.f32.mrb[0].mxu0
      %v2243 = vadd.f32 0.0, %v2242
      %v2244 = vpop.f32.mrb[0].mxu0
      %v2245 = vpop.f32.mrb[0].mxu0
      %v2246 = vadd.f32 0.0, %v2245
      %v2247 = vpop.f32.mrb[0].mxu0
      %2248 = vmatprep.mubr.bf16.mxu0 0
      %2249 = vmatmul.mubr.bf16.gmra.mrb[0].mxu0 %v2108
      %v2250 = vpop.f32.mrb[0].mxu0
      %v2251 = vadd.f32 0.0, %v2250
      %v2252 = vpop.f32.mrb[0].mxu0
      %v2253 = vpop.f32.mrb[0].mxu0
      %v2254 = vadd.f32 0.0, %v2253
      %v2255 = vpop.f32.mrb[0].mxu0
      %2256 = vmatprep.mubr.bf16.mxu0 0
      %2257 = vmatmul.mubr.bf16.gmra.mrb[0].mxu0 %v2110
      %v2258 = vpop.f32.mrb[0].mxu0
      %v2259 = vadd.f32 0.0, %v2258
      %v2260 = vpop.f32.mrb[0].mxu0
      %v2261 = vpop.f32.mrb[0].mxu0
      %v2262 = vadd.f32 0.0, %v2261
      %v2263 = vpop.f32.mrb[0].mxu0
      %2264 = vmatprep.mubr.bf16.mxu0 0
      %2265 = vmatmul.mubr.bf16.gmra.mrb[0].mxu0 %v2112
      %v2266 = vpop.f32.mrb[0].mxu0
      %v2267 = vadd.f32 0.0, %v2266
      %v2268 = vpop.f32.mrb[0].mxu0
      %v2269 = vpop.f32.mrb[0].mxu0
      %v2270 = vadd.f32 0.0, %v2269
      %v2271 = vpop.f32.mrb[0].mxu0
      %2272 = vmatprep.mubr.bf16.mxu0 0
      %2273 = vmatmul.mubr.bf16.gmra.mrb[0].mxu0 %v2114
      %v2274 = vpop.f32.mrb[0].mxu0
      %v2275 = vadd.f32 0.0, %v2274
      %v2276 = vpop.f32.mrb[0].mxu0
      %v2277 = vpop.f32.mrb[0].mxu0
      %v2278 = vadd.f32 0.0, %v2277
      %v2279 = vpop.f32.mrb[0].mxu0
      %2280 = vdwg.mxu0
      %v2281 = vld [vmem:[%s264] sm:$0x1]
      %v2283 = vlaneseq
      %v2284 = vshrl.u32 %v2283, 7
      %v2285 = vsub.s32 0, %v2284
      %v2286 = vrot.slane %v2281, %v2285
      %v2288 = vmul.f32 %v2155, %v2286
      %v2289 = vmul.f32 %v2158, %v2286
      %v2290 = vmul.f32 %v2163, %v2286
      %v2291 = vmul.f32 %v2166, %v2286
      %v2292 = vmul.f32 %v2171, %v2286
      %v2293 = vmul.f32 %v2174, %v2286
      %v2294 = vmul.f32 %v2179, %v2286
      %v2295 = vmul.f32 %v2182, %v2286
      %v2296 = vmul.f32 %v2187, %v2286
      %v2297 = vmul.f32 %v2190, %v2286
      %v2298 = vmul.f32 %v2195, %v2286
      %v2299 = vmul.f32 %v2198, %v2286
      %v2300 = vmul.f32 %v2203, %v2286
      %v2301 = vmul.f32 %v2206, %v2286
      %v2302 = vmul.f32 %v2211, %v2286
      %v2303 = vmul.f32 %v2214, %v2286
      %v2304 = vmul.f32 %v2219, %v2286
      %v2305 = vmul.f32 %v2222, %v2286
      %v2306 = vmul.f32 %v2227, %v2286
      %v2307 = vmul.f32 %v2230, %v2286
      %v2308 = vmul.f32 %v2235, %v2286
      %v2309 = vmul.f32 %v2238, %v2286
      %v2310 = vmul.f32 %v2243, %v2286
      %v2311 = vmul.f32 %v2246, %v2286
      %v2312 = vmul.f32 %v2251, %v2286
      %v2313 = vmul.f32 %v2254, %v2286
      %v2314 = vmul.f32 %v2259, %v2286
      %v2315 = vmul.f32 %v2262, %v2286
      %v2316 = vmul.f32 %v2267, %v2286
      %v2317 = vmul.f32 %v2270, %v2286
      %v2318 = vmul.f32 %v2275, %v2286
      %v2319 = vmul.f32 %v2278, %v2286
      %v2320 = vld [vmem:[%s267] sm:$0x1]
      %v2322 = vlaneseq
      %v2323 = vshrl.u32 %v2322, 7
      %v2324 = vsub.s32 0, %v2323
      %v2325 = vrot.slane %v2320, %v2324
      %v2327 = vadd.f32 %v2288, %v2325
      %v2328 = vadd.f32 %v2289, %v2325
      %v2329 = vadd.f32 %v2290, %v2325
      %v2330 = vadd.f32 %v2291, %v2325
      %v2331 = vadd.f32 %v2292, %v2325
      %v2332 = vadd.f32 %v2293, %v2325
      %v2333 = vadd.f32 %v2294, %v2325
      %v2334 = vadd.f32 %v2295, %v2325
      %v2335 = vadd.f32 %v2296, %v2325
      %v2336 = vadd.f32 %v2297, %v2325
      %v2337 = vadd.f32 %v2298, %v2325
      %v2338 = vadd.f32 %v2299, %v2325
      %v2339 = vadd.f32 %v2300, %v2325
      %v2340 = vadd.f32 %v2301, %v2325
      %v2341 = vadd.f32 %v2302, %v2325
      %v2342 = vadd.f32 %v2303, %v2325
      %v2343 = vadd.f32 %v2304, %v2325
      %v2344 = vadd.f32 %v2305, %v2325
      %v2345 = vadd.f32 %v2306, %v2325
      %v2346 = vadd.f32 %v2307, %v2325
      %v2347 = vadd.f32 %v2308, %v2325
      %v2348 = vadd.f32 %v2309, %v2325
      %v2349 = vadd.f32 %v2310, %v2325
      %v2350 = vadd.f32 %v2311, %v2325
      %v2351 = vadd.f32 %v2312, %v2325
      %v2352 = vadd.f32 %v2313, %v2325
      %v2353 = vadd.f32 %v2314, %v2325
      %v2354 = vadd.f32 %v2315, %v2325
      %v2355 = vadd.f32 %v2316, %v2325
      %v2356 = vadd.f32 %v2317, %v2325
      %v2357 = vadd.f32 %v2318, %v2325
      %v2358 = vadd.f32 %v2319, %v2325
      %v2359 = vmax.f32 %v2327, 0.0
      %v2360 = vmax.f32 %v2328, 0.0
      %v2361 = vmax.f32 %v2329, 0.0
      %v2362 = vmax.f32 %v2330, 0.0
      %v2363 = vmax.f32 %v2331, 0.0
      %v2364 = vmax.f32 %v2332, 0.0
      %v2365 = vmax.f32 %v2333, 0.0
      %v2366 = vmax.f32 %v2334, 0.0
      %v2367 = vmax.f32 %v2335, 0.0
      %v2368 = vmax.f32 %v2336, 0.0
      %v2369 = vmax.f32 %v2337, 0.0
      %v2370 = vmax.f32 %v2338, 0.0
      %v2371 = vmax.f32 %v2339, 0.0
      %v2372 = vmax.f32 %v2340, 0.0
      %v2373 = vmax.f32 %v2341, 0.0
      %v2374 = vmax.f32 %v2342, 0.0
      %v2375 = vmax.f32 %v2343, 0.0
      %v2376 = vmax.f32 %v2344, 0.0
      %v2377 = vmax.f32 %v2345, 0.0
      %v2378 = vmax.f32 %v2346, 0.0
      %v2379 = vmax.f32 %v2347, 0.0
      %v2380 = vmax.f32 %v2348, 0.0
      %v2381 = vmax.f32 %v2349, 0.0
      %v2382 = vmax.f32 %v2350, 0.0
      %v2383 = vmax.f32 %v2351, 0.0
      %v2384 = vmax.f32 %v2352, 0.0
      %v2385 = vmax.f32 %v2353, 0.0
      %v2386 = vmax.f32 %v2354, 0.0
      %v2387 = vmax.f32 %v2355, 0.0
      %v2388 = vmax.f32 %v2356, 0.0
      %v2389 = vmax.f32 %v2357, 0.0
      %v2390 = vmax.f32 %v2358, 0.0
      %2391 = vst [vmem:[%s279] sm:$0xff] %v2359
      %2392 = vst [vmem:[%s279 + $0x8] sm:$0xff] %v2360
      %2393 = vst [vmem:[%s279 + $0x10] sm:$0xff] %v2361
      %2394 = vst [vmem:[%s279 + $0x18] sm:$0xff] %v2362
      %2395 = vst [vmem:[%s279 + $0x20] sm:$0xff] %v2363
      %2396 = vst [vmem:[%s279 + $0x28] sm:$0xff] %v2364
      %2397 = vst [vmem:[%s279 + $0x30] sm:$0xff] %v2365
      %2398 = vst [vmem:[%s279 + $0x38] sm:$0xff] %v2366
      %2399 = vst [vmem:[%s279 + $0x40] sm:$0xff] %v2367
      %2400 = vst [vmem:[%s279 + $0x48] sm:$0xff] %v2368
      %2401 = vst [vmem:[%s279 + $0x50] sm:$0xff] %v2369
      %2402 = vst [vmem:[%s279 + $0x58] sm:$0xff] %v2370
      %2403 = vst [vmem:[%s279 + $0x60] sm:$0xff] %v2371
      %2404 = vst [vmem:[%s279 + $0x68] sm:$0xff] %v2372
      %2405 = vst [vmem:[%s279 + $0x70] sm:$0xff] %v2373
      %2406 = vst [vmem:[%s279 + $0x78] sm:$0xff] %v2374
      %2407 = vst [vmem:[%s279 + $0x80] sm:$0xff] %v2375
      %2408 = vst [vmem:[%s279 + $0x88] sm:$0xff] %v2376
      %2409 = vst [vmem:[%s279 + $0x90] sm:$0xff] %v2377
      %2410 = vst [vmem:[%s279 + $0x98] sm:$0xff] %v2378
      %2411 = vst [vmem:[%s279 + $0xa0] sm:$0xff] %v2379
      %2412 = vst [vmem:[%s279 + $0xa8] sm:$0xff] %v2380
      %2413 = vst [vmem:[%s279 + $0xb0] sm:$0xff] %v2381
      %2414 = vst [vmem:[%s279 + $0xb8] sm:$0xff] %v2382
      %2415 = vst [vmem:[%s279 + $0xc0] sm:$0xff] %v2383
      %2416 = vst [vmem:[%s279 + $0xc8] sm:$0xff] %v2384
      %2417 = vst [vmem:[%s279 + $0xd0] sm:$0xff] %v2385
      %2418 = vst [vmem:[%s279 + $0xd8] sm:$0xff] %v2386
      %2419 = vst [vmem:[%s279 + $0xe0] sm:$0xff] %v2387
      %2420 = vst [vmem:[%s279 + $0xe8] sm:$0xff] %v2388
      %2421 = vst [vmem:[%s279 + $0xf0] sm:$0xff] %v2389
      %2422 = vst [vmem:[%s279 + $0xf8] sm:$0xff] %v2390
      %p2423 = scmp.lt.s32.totalorder %s20, 1
      %s2424 = scalar_select %p2423, %s20, 1
      %p2425 = scmp.lt.s32.totalorder %s22, 0
      %s2426 = scalar_select %p2425, %s22, 0
      %p2427 = scmp.lt.s32.totalorder %s21, 0
      %s2428 = scalar_select %p2427, %s21, 0
      %s2429 = smul.addr %s2426, 32
      %s2430 = sadd.s32 %s2428, %s2429
      %s2431 = smul.addr %s2424, 32
      %s2432 = sadd.s32 %s2430, %s2431
      %s2433 = smul.addr %s2432, 8
      %s2434 = scalar_lea.vmem %s4, %s2433
      // Predicated region
      $region37: #{bn_conv2d.1} parent=35 // pred_check
        %p2435 = pneg %p160
      $region38: #{bn_conv2d.1} parent=35 // pred_check_branch
        %2437 = sbr.rel (%p2435) target = $region40
      $region39: #{bn_conv2d.1} parent=35 // pred_region
        _
      $region40: #{bn_conv2d.1} parent=35 // pred_fallthru
        _
    $region36: #{bn_conv2d.1} parent=5 // pred_fallthru
      _
    %p2438 = scmp.le.s32.totalorder 2, %s10
    // Predicated region
    $region41: #{bn_conv2d.1} parent=5 // pred_check
      %p2439 = pneg %p2438
    $region42: #{bn_conv2d.1} parent=5 // pred_check_branch
      %2441 = sbr.rel (%p2439) target = $region44
    $region43: #{bn_conv2d.1} parent=5 // pred_region
      %s2442 = ssub.s32 %s10, 2
      // Predicated region
      $region45: #{bn_conv2d.1} parent=43 // pred_check
        %p2443 = pneg %p166
      $region46: #{bn_conv2d.1} parent=43 // pred_check_branch
        %2445 = sbr.rel (%p2443) target = $region48
      $region47: #{bn_conv2d.1} parent=43 // pred_region
        %p2446 = scmp.lt.s32.totalorder %s23, 1
        %s2447 = scalar_select %p2446, %s23, 1
        %p2448 = scmp.lt.s32.totalorder %s25, 0
        %s2449 = scalar_select %p2448, %s25, 0
        %p2450 = scmp.lt.s32.totalorder %s24, 0
        %s2451 = scalar_select %p2450, %s24, 0
        %s2452 = smul.addr %s2449, 32
        %s2453 = sadd.s32 %s2451, %s2452
        %s2454 = smul.addr %s2447, 32
        %s2455 = sadd.s32 %s2453, %s2454
        %s2456 = smul.addr %s2455, 8
        %s2457 = scalar_lea.vmem %s4, %s2456
      $region48: #{bn_conv2d.1} parent=43 // pred_fallthru
        _
    $region44: #{bn_conv2d.1} parent=5 // pred_fallthru
      _
  $region6: #{bn_conv2d.1} parent=0 // loop_footer
    %s14 = sadd.s32 1, %s10
  $region7: #{bn_conv2d.1} parent=0 // loop_footer_branch
    %9 = sbr.rel target = $region3
  $region8: #{bn_conv2d.1} parent=0 // loop_exit
    _

</llo_original>
